<compile_context>
chip_gen: v6e
topology: v6e:2x2x1
jax: 0.10.0
libtpu: 0.0.40
codegen_flags: <defaults>
</compile_context>

<pallas_src>
import functools

import jax
import jax.numpy as jnp
from jax.experimental import pallas as pl
from jax.experimental.pallas import tpu as pltpu

BN_EPS = 1e-5


# ----------------------------------------------------------------------------
# Shared in-kernel helpers
# ----------------------------------------------------------------------------
def _linear_relu(x_ref, w_ref, b_ref):
    """ReLU(x @ W + b) with bf16 MXU operands and f32 accumulation."""
    y = jnp.dot(x_ref[...].astype(jnp.bfloat16), w_ref[...],
                preferred_element_type=jnp.float32) + b_ref[...]
    return jnp.maximum(y, 0.0)


def _bn_scale_shift(s, sq, gamma, beta, n_rows):
    """Fold batch stats + affine params into (scale, shift)."""
    inv_n = 1.0 / n_rows
    mu = s * inv_n
    var = jnp.maximum(sq * inv_n - mu * mu, 0.0)   # biased batch variance
    scale = gamma * jax.lax.rsqrt(var + BN_EPS)
    shift = beta - mu * scale
    return scale, shift


# ----------------------------------------------------------------------------
# Fused single-pass kernel (activation resident in the VMEM output block)
# ----------------------------------------------------------------------------
def tdnn_fused_kernel(x_ref, w_ref, b_ref, gamma_ref, beta_ref,
                      o_ref, sum_ref, sq_ref,
                      *, n_rows, tile_n, n_tiles, needs_mask):
    """Per grid step: y = ReLU(x@W+b), accumulate stats, stash y in the
    VMEM-resident output block; on the last step finalize BN and normalize
    every stashed tile in place.

    x_ref:  (tile_n, K) f32   row tile of the flattened (B*T, K) input
    w_ref:  (K, O)      bf16  (resident; constant index_map)
    b/gamma/beta_ref: (1, O) f32
    o_ref:  (n_pad, O)  f32   full output, VMEM-resident across the grid
    sum_ref, sq_ref: (1, O) f32 VMEM scratch accumulators
    """
    i = pl.program_id(0)

    @pl.when(i == 0)
    def _init():
        sum_ref[...] = jnp.zeros_like(sum_ref)
        sq_ref[...] = jnp.zeros_like(sq_ref)

    y = _linear_relu(x_ref, w_ref, b_ref)

    # Mask padding rows out of the BN statistics only when the row count is
    # not tile-aligned (statically known -> no dead work otherwise).
    if needs_mask:
        row = i * tile_n + jax.lax.broadcasted_iota(jnp.int32, (tile_n, 1), 0)
        ys = jnp.where(row < n_rows, y, 0.0)
    else:
        ys = y

    sum_ref[...] += jnp.sum(ys, axis=0, keepdims=True)
    sq_ref[...] += jnp.sum(ys * ys, axis=0, keepdims=True)

    # Stash this tile's activations in the resident output block (skip for the
    # last tile: it is normalized directly from registers in _finalize).
    if n_tiles > 1:
        @pl.when(i < n_tiles - 1)
        def _stash():
            row0 = pl.multiple_of(i * tile_n, tile_n)
            o_ref[pl.ds(row0, tile_n), :] = y

    @pl.when(i == n_tiles - 1)
    def _finalize():
        scale, shift = _bn_scale_shift(sum_ref[...], sq_ref[...],
                                       gamma_ref[...], beta_ref[...], n_rows)
        # Last tile: activations are still live, normalize directly.
        o_ref[pl.ds((n_tiles - 1) * tile_n, tile_n), :] = y * scale + shift
        # Previously stashed tiles: normalize in place (static unroll).
        for t in range(n_tiles - 1):
            sl = pl.ds(t * tile_n, tile_n)
            o_ref[sl, :] = o_ref[sl, :] * scale + shift


# ----------------------------------------------------------------------------
# Fallback two-pass kernels (only for B*T too large for a resident activation)
# ----------------------------------------------------------------------------
def tdnn_stats_kernel(x_ref, w_ref, b_ref, gamma_ref, beta_ref, ss_ref,
                      sum_ref, sq_ref, *, n_rows, tile_n, needs_mask):
    i = pl.program_id(0)

    @pl.when(i == 0)
    def _init():
        sum_ref[...] = jnp.zeros_like(sum_ref)
        sq_ref[...] = jnp.zeros_like(sq_ref)

    y = _linear_relu(x_ref, w_ref, b_ref)
    if needs_mask:
        row = i * tile_n + jax.lax.broadcasted_iota(jnp.int32, (tile_n, 1), 0)
        y = jnp.where(row < n_rows, y, 0.0)

    sum_ref[...] += jnp.sum(y, axis=0, keepdims=True)
    sq_ref[...] += jnp.sum(y * y, axis=0, keepdims=True)

    @pl.when(i == pl.num_programs(0) - 1)
    def _finalize():
        scale, shift = _bn_scale_shift(sum_ref[...], sq_ref[...],
                                       gamma_ref[...], beta_ref[...], n_rows)
        ss_ref[0:1, :] = scale
        ss_ref[1:2, :] = shift


def tdnn_norm_kernel(x_ref, w_ref, b_ref, ss_ref, o_ref):
    y = _linear_relu(x_ref, w_ref, b_ref)
    o_ref[...] = y * ss_ref[0:1, :] + ss_ref[1:2, :]


# ----------------------------------------------------------------------------
# Wrapper: fused Linear -> ReLU -> BatchNorm (training-mode batch stats)
# ----------------------------------------------------------------------------
def tdnn_forward(x, p, *, tile_n=256, fused_vmem_budget=8 * 1024 * 1024):
    """x: (B, T, K) f32 -> (B, T, O) f32.  context_size=1 / dilation=1 TDNN."""
    B, T, K = x.shape
    O = p["w"].shape[1]
    N = B * T

    x2 = x.reshape(N, K)
    if x2.dtype != jnp.float32:
        x2 = x2.astype(jnp.float32)

    tn = min(tile_n, pl.cdiv(N, 8) * 8)       # row tile, multiple of 8
    n_tiles = pl.cdiv(N, tn)
    n_pad = n_tiles * tn
    needs_mask = (n_pad != N)                 # ragged tail handled in-kernel

    x_spec = pl.BlockSpec((tn, K), lambda i: (i, 0))
    w_spec = pl.BlockSpec((K, O), lambda i: (0, 0))
    vec_spec = pl.BlockSpec((1, O), lambda i: (0, 0))

    if n_pad * O * 4 <= fused_vmem_budget:
        # Single fused pass: activation lives in the VMEM-resident output.
        out = pl.pallas_call(
            functools.partial(tdnn_fused_kernel, n_rows=N, tile_n=tn,
                              n_tiles=n_tiles, needs_mask=needs_mask),
            out_shape=jax.ShapeDtypeStruct((n_pad, O), jnp.float32),
            grid=(n_tiles,),
            in_specs=[x_spec, w_spec, vec_spec, vec_spec, vec_spec],
            out_specs=pl.BlockSpec((n_pad, O), lambda i: (0, 0)),
            scratch_shapes=[pltpu.VMEM((1, O), jnp.float32),
                            pltpu.VMEM((1, O), jnp.float32)],
            compiler_params=pltpu.CompilerParams(
                dimension_semantics=("arbitrary",)),
        )(x2, p["w"], p["b"], p["gamma"], p["beta"])
        if n_pad != N:
            out = out[:N]
        return out.reshape(B, T, O)

    # ---- Fallback for large B*T (keeps VMEM tile-sized, recomputes matmul) --
    ss_spec = pl.BlockSpec((2, O), lambda i: (0, 0))

    ss = pl.pallas_call(
        functools.partial(tdnn_stats_kernel, n_rows=N, tile_n=tn,
                          needs_mask=needs_mask),
        out_shape=jax.ShapeDtypeStruct((2, O), jnp.float32),
        grid=(n_tiles,),
        in_specs=[x_spec, w_spec, vec_spec, vec_spec, vec_spec],
        out_specs=ss_spec,
        scratch_shapes=[pltpu.VMEM((1, O), jnp.float32),
                        pltpu.VMEM((1, O), jnp.float32)],
        compiler_params=pltpu.CompilerParams(
            dimension_semantics=("arbitrary",)),
    )(x2, p["w"], p["b"], p["gamma"], p["beta"])

    y = pl.pallas_call(
        tdnn_norm_kernel,
        out_shape=jax.ShapeDtypeStruct((N, O), jnp.float32),
        grid=(n_tiles,),
        in_specs=[x_spec, w_spec, vec_spec, ss_spec],
        out_specs=pl.BlockSpec((tn, O), lambda i: (i, 0)),
        compiler_params=pltpu.CompilerParams(
            dimension_semantics=("parallel",)),
    )(x2, p["w"], p["b"], ss)

    return y.reshape(B, T, O)


def xvector_trainer_forward(x, params):
    """xvector_trainer.forward: a single segment7 TDNN (512 -> 512, context 1).

    context_size=1 / dilation=1 makes F.unfold an identity reshape, so no
    context expansion is needed; dropout_p=0 so dropout is a no-op.
    """
    return tdnn_forward(x, params["segment7"])


# ----------------------------------------------------------------------------
# Deterministic parameter construction (mirrors nn.Linear / BatchNorm1d init,
# with non-trivial gamma/beta so the BN path is exercised)
# ----------------------------------------------------------------------------
def init_tdnn_params(key, input_dim, output_dim, context_size=1):
    K = input_dim * context_size
    kw, kb, kg, kbe = jax.random.split(key, 4)
    bound = float(K) ** -0.5
    w = jax.random.uniform(kw, (K, output_dim), jnp.float32, -bound, bound)
    return {
        # stored as (K, O) = transpose of nn.Linear's (O, K); bf16 MXU operand
        "w": w.astype(jnp.bfloat16),
        "b": jax.random.uniform(kb, (1, output_dim), jnp.float32, -bound, bound),
        "gamma": 1.0 + 0.1 * jax.random.normal(kg, (1, output_dim), jnp.float32),
        "beta": 0.1 * jax.random.normal(kbe, (1, output_dim), jnp.float32),
    }


# ----------------------------------------------------------------------------
# Main
# ----------------------------------------------------------------------------
if __name__ == "__main__":
    key = jax.random.PRNGKey(0)
    k_param, k_input = jax.random.split(key)

    batch, seq_len, feat = 2, 128, 512   # segment7: input_dim=512, output_dim=512

    params = {"segment7": init_tdnn_params(k_param, feat, 512, context_size=1)}
    x = jax.random.normal(k_input, (batch, seq_len, feat), jnp.float32)

    out = jax.jit(xvector_trainer_forward)(x, params)
    out = jax.block_until_ready(out)

    assert out.shape == (batch, seq_len, 512), out.shape
    assert out.dtype == jnp.float32
    print("KERNEL_OK")
</pallas_src>

<mosaic_0001>
module attributes {stable_mosaic.version = 11 : i64} {
  func.func @tdnn_fused_kernel(%arg0: i32, %arg1: memref<256x512xf32, #tpu.memory_space<vmem>>, %arg2: memref<512x512xbf16, #tpu.memory_space<vmem>>, %arg3: memref<1x512xf32, #tpu.memory_space<vmem>>, %arg4: memref<1x512xf32, #tpu.memory_space<vmem>>, %arg5: memref<1x512xf32, #tpu.memory_space<vmem>>, %arg6: memref<256x512xf32, #tpu.memory_space<vmem>>, %arg7: memref<1x512xf32, #tpu.memory_space<vmem>>, %arg8: memref<1x512xf32, #tpu.memory_space<vmem>>) attributes {dimension_semantics = [#tpu.dimension_semantics<arbitrary>], iteration_bounds = array<i64: 1>, scalar_prefetch = 0 : i64, scratch_operands = 2 : i64, tpu.core_type = #tpu.core_type<tc>, window_params = [{transform_indices = @transform_0, window_bounds = array<i64: 256, 512>}, {pipeline_mode = #tpu.pipeline_mode<synchronous>, transform_indices = @transform_1, window_bounds = array<i64: 512, 512>}, {pipeline_mode = #tpu.pipeline_mode<synchronous>, transform_indices = @transform_2, window_bounds = array<i64: 1, 512>}, {pipeline_mode = #tpu.pipeline_mode<synchronous>, transform_indices = @transform_3, window_bounds = array<i64: 1, 512>}, {pipeline_mode = #tpu.pipeline_mode<synchronous>, transform_indices = @transform_4, window_bounds = array<i64: 1, 512>}, {pipeline_mode = #tpu.pipeline_mode<synchronous>, transform_indices = @transform_5, window_bounds = array<i64: 256, 512>}]} {
    %c0_i32 = arith.constant 0 : i32
    %0 = arith.cmpi eq, %arg0, %c0_i32 : i32
    %1 = arith.extui %0 : i1 to i32
    %c0_i32_0 = arith.constant 0 : i32
    %2 = arith.cmpi ne, %1, %c0_i32_0 : i32
    scf.if %2 {
      %cst_19 = arith.constant 0.000000e+00 : f32
      %26 = vector.broadcast %cst_19 : f32 to vector<1x512xf32>
      %c0_20 = arith.constant 0 : index
      %c0_21 = arith.constant 0 : index
      %27 = vector.load %arg7[%c0_20, %c0_21] : memref<1x512xf32, #tpu.memory_space<vmem>>, vector<1x512xf32>
      tpu.vector_store %arg7[%c0_20, %c0_21], %26 {strides = array<i32>} : memref<1x512xf32, #tpu.memory_space<vmem>>, vector<1x512xf32>,
      %cst_22 = arith.constant 0.000000e+00 : f32
      %28 = vector.broadcast %cst_22 : f32 to vector<1x512xf32>
      %c0_23 = arith.constant 0 : index
      %c0_24 = arith.constant 0 : index
      %29 = vector.load %arg8[%c0_23, %c0_24] : memref<1x512xf32, #tpu.memory_space<vmem>>, vector<1x512xf32>
      tpu.vector_store %arg8[%c0_23, %c0_24], %28 {strides = array<i32>} : memref<1x512xf32, #tpu.memory_space<vmem>>, vector<1x512xf32>,
    } else {
    }
    %c0 = arith.constant 0 : index
    %c0_1 = arith.constant 0 : index
    %3 = vector.load %arg1[%c0, %c0_1] : memref<256x512xf32, #tpu.memory_space<vmem>>, vector<256x512xf32>
    %4 = arith.truncf %3 : vector<256x512xf32> to vector<256x512xbf16>
    %c0_2 = arith.constant 0 : index
    %c0_3 = arith.constant 0 : index
    %5 = vector.load %arg2[%c0_2, %c0_3] : memref<512x512xbf16, #tpu.memory_space<vmem>>, vector<512x512xbf16>
    %cst = arith.constant dense<0.000000e+00> : vector<256x512xf32>
    %6 = tpu.matmul %4, %5, %cst {dimension_numbers = #tpu.dot_dimension_numbers<[1], [0], [0], [1], [0, 0, 1, 1], [], []>} : vector<256x512xbf16>, vector<512x512xbf16>, vector<256x512xf32> -> vector<256x512xf32>
    %c0_4 = arith.constant 0 : index
    %c0_5 = arith.constant 0 : index
    %7 = vector.load %arg3[%c0_4, %c0_5] : memref<1x512xf32, #tpu.memory_space<vmem>>, vector<1x512xf32>
    %8 = vector.broadcast %7 : vector<1x512xf32> to vector<256x512xf32>
    %9 = arith.addf %6, %8 : vector<256x512xf32>
    %cst_6 = arith.constant 0.000000e+00 : f32
    %10 = vector.broadcast %cst_6 : f32 to vector<256x512xf32>
    %11 = arith.maximumf %9, %10 : vector<256x512xf32>
    %c0_7 = arith.constant 0 : index
    %c0_8 = arith.constant 0 : index
    %12 = vector.load %arg7[%c0_7, %c0_8] : memref<1x512xf32, #tpu.memory_space<vmem>>, vector<1x512xf32>
    %cst_9 = arith.constant dense<0.000000e+00> : vector<512xf32>
    %13 = vector.multi_reduction <add>, %11, %cst_9 [0] : vector<256x512xf32> to vector<512xf32>
    %14 = vector.shape_cast %13 : vector<512xf32> to vector<1x512xf32>
    %15 = arith.addf %12, %14 : vector<1x512xf32>
    %c0_10 = arith.constant 0 : index
    %c0_11 = arith.constant 0 : index
    %16 = vector.load %arg7[%c0_10, %c0_11] : memref<1x512xf32, #tpu.memory_space<vmem>>, vector<1x512xf32>
    tpu.vector_store %arg7[%c0_10, %c0_11], %15 {strides = array<i32>} : memref<1x512xf32, #tpu.memory_space<vmem>>, vector<1x512xf32>,
    %c0_12 = arith.constant 0 : index
    %c0_13 = arith.constant 0 : index
    %17 = vector.load %arg8[%c0_12, %c0_13] : memref<1x512xf32, #tpu.memory_space<vmem>>, vector<1x512xf32>
    %18 = arith.mulf %11, %11 : vector<256x512xf32>
    %cst_14 = arith.constant dense<0.000000e+00> : vector<512xf32>
    %19 = vector.multi_reduction <add>, %18, %cst_14 [0] : vector<256x512xf32> to vector<512xf32>
    %20 = vector.shape_cast %19 : vector<512xf32> to vector<1x512xf32>
    %21 = arith.addf %17, %20 : vector<1x512xf32>
    %c0_15 = arith.constant 0 : index
    %c0_16 = arith.constant 0 : index
    %22 = vector.load %arg8[%c0_15, %c0_16] : memref<1x512xf32, #tpu.memory_space<vmem>>, vector<1x512xf32>
    tpu.vector_store %arg8[%c0_15, %c0_16], %21 {strides = array<i32>} : memref<1x512xf32, #tpu.memory_space<vmem>>, vector<1x512xf32>,
    %c0_i32_17 = arith.constant 0 : i32
    %23 = arith.cmpi eq, %arg0, %c0_i32_17 : i32
    %24 = arith.extui %23 : i1 to i32
    %c0_i32_18 = arith.constant 0 : i32
    %25 = arith.cmpi ne, %24, %c0_i32_18 : i32
    scf.if %25 {
      %c0_19 = arith.constant 0 : index
      %c0_20 = arith.constant 0 : index
      %26 = vector.load %arg7[%c0_19, %c0_20] : memref<1x512xf32, #tpu.memory_space<vmem>>, vector<1x512xf32>
      %c0_21 = arith.constant 0 : index
      %c0_22 = arith.constant 0 : index
      %27 = vector.load %arg8[%c0_21, %c0_22] : memref<1x512xf32, #tpu.memory_space<vmem>>, vector<1x512xf32>
      %c0_23 = arith.constant 0 : index
      %c0_24 = arith.constant 0 : index
      %28 = vector.load %arg4[%c0_23, %c0_24] : memref<1x512xf32, #tpu.memory_space<vmem>>, vector<1x512xf32>
      %c0_25 = arith.constant 0 : index
      %c0_26 = arith.constant 0 : index
      %29 = vector.load %arg5[%c0_25, %c0_26] : memref<1x512xf32, #tpu.memory_space<vmem>>, vector<1x512xf32>
      %cst_27 = arith.constant 3.906250e-03 : f32
      %30 = vector.broadcast %cst_27 : f32 to vector<1x512xf32>
      %31 = arith.mulf %26, %30 : vector<1x512xf32>
      %cst_28 = arith.constant 3.906250e-03 : f32
      %32 = vector.broadcast %cst_28 : f32 to vector<1x512xf32>
      %33 = arith.mulf %27, %32 : vector<1x512xf32>
      %34 = arith.mulf %31, %31 : vector<1x512xf32>
      %35 = arith.subf %33, %34 : vector<1x512xf32>
      %cst_29 = arith.constant 0.000000e+00 : f32
      %36 = vector.broadcast %cst_29 : f32 to vector<1x512xf32>
      %37 = arith.maximumf %35, %36 : vector<1x512xf32>
      %cst_30 = arith.constant 9.99999974E-6 : f32
      %38 = vector.broadcast %cst_30 : f32 to vector<1x512xf32>
      %39 = arith.addf %37, %38 : vector<1x512xf32>
      %40 = math.rsqrt %39 : vector<1x512xf32>
      %41 = arith.mulf %28, %40 : vector<1x512xf32>
      %42 = arith.mulf %31, %41 : vector<1x512xf32>
      %43 = arith.subf %29, %42 : vector<1x512xf32>
      %44 = vector.broadcast %41 : vector<1x512xf32> to vector<256x512xf32>
      %45 = arith.mulf %11, %44 : vector<256x512xf32>
      %46 = vector.broadcast %43 : vector<1x512xf32> to vector<256x512xf32>
      %47 = arith.addf %45, %46 : vector<256x512xf32>
      %c0_31 = arith.constant 0 : index
      %c0_32 = arith.constant 0 : index
      %48 = vector.load %arg6[%c0_31, %c0_32] : memref<256x512xf32, #tpu.memory_space<vmem>>, vector<256x512xf32>
      tpu.vector_store %arg6[%c0_31, %c0_32], %47 {strides = array<i32>} : memref<256x512xf32, #tpu.memory_space<vmem>>, vector<256x512xf32>,
    } else {
    }
    return
  }
  func.func @transform_0(%arg0: i32) -> (i32, i32) {
    %c0_i32 = arith.constant 0 : i32
    %c0_i32_0 = arith.constant 0 : i32
    return %arg0, %c0_i32 : i32, i32
  }
  func.func @transform_1(%arg0: i32) -> (i32, i32) {
    %c0_i32 = arith.constant 0 : i32
    %c0_i32_0 = arith.constant 0 : i32
    %c0_i32_1 = arith.constant 0 : i32
    return %c0_i32, %c0_i32_0 : i32, i32
  }
  func.func @transform_2(%arg0: i32) -> (i32, i32) {
    %c0_i32 = arith.constant 0 : i32
    %c0_i32_0 = arith.constant 0 : i32
    %c0_i32_1 = arith.constant 0 : i32
    return %c0_i32, %c0_i32_0 : i32, i32
  }
  func.func @transform_3(%arg0: i32) -> (i32, i32) {
    %c0_i32 = arith.constant 0 : i32
    %c0_i32_0 = arith.constant 0 : i32
    %c0_i32_1 = arith.constant 0 : i32
    return %c0_i32, %c0_i32_0 : i32, i32
  }
  func.func @transform_4(%arg0: i32) -> (i32, i32) {
    %c0_i32 = arith.constant 0 : i32
    %c0_i32_0 = arith.constant 0 : i32
    %c0_i32_1 = arith.constant 0 : i32
    return %c0_i32, %c0_i32_0 : i32, i32
  }
  func.func @transform_5(%arg0: i32) -> (i32, i32) {
    %c0_i32 = arith.constant 0 : i32
    %c0_i32_0 = arith.constant 0 : i32
    %c0_i32_1 = arith.constant 0 : i32
    return %c0_i32, %c0_i32_0 : i32, i32
  }
}

</mosaic_0001>

<llo_original>
// kernel: xvector_trainer_forward.1
$region0: #{xvector_trainer_forward.1}
  #allocation0 [shape = 'u32[]', space=smem, size = 0x4, offset = 0x4, fixed_abs, tag = 'smem constant byte address 0x4 - core index']
  #allocation1 [shape = 'u32[144,128]{1,0:T(1,128)}', space=vmem, size = 0x12000, scoped, tag = 'internal scratch']
  #allocation2 [shape = 'f32[1,512]{1,0:T(1,128)}', space=vmem, size = 0x800, scoped, tag = 'scratch operand']
  #allocation3 [shape = 'f32[1,512]{1,0:T(1,128)}', space=vmem, size = 0x800, scoped, tag = 'scratch operand']
  %s0 = inlined_call_operand.hbm [shape: f32[256,512], index: 0, kind: input, shape index: {}]
  %s1 = inlined_call_operand.hbm [shape: bf16[512,512], index: 1, kind: input, shape index: {}]
  %s2 = inlined_call_operand.hbm [shape: f32[1,512], index: 2, kind: input, shape index: {}]
  %s3 = inlined_call_operand.vmem [shape: f32[1,512], index: 3, kind: input, shape index: {}]
  %s4 = inlined_call_operand.hbm [shape: f32[1,512], index: 4, kind: input, shape index: {}]
  %s5 = inlined_call_operand.hbm [shape: f32[256,512], index: 5, kind: output, shape index: {}]
  %s6 = sld [smem:[#allocation0]]
  $region54: #{xvector_trainer_forward.1} parent=0
    _
  %s8 = ssub.s32 1, %s6
  %s9 = scalar_select 0, %s8, %s6
  $region1: #{xvector_trainer_forward.1} parent=0
    #allocation4 [shape = 'u8[524288]{0}', space=vmem, size = 0x80000, scoped, tag = 'input window, operand 0, single buffered']
    #allocation5 [shape = 's32[1]{0}', space=sflag, size = 0x4, scoped, tag = 'scoped memory for xvector_trainer_forward.1']
    #allocation6 [shape = 's32[1]{0}', space=sflag, size = 0x4, scoped, tag = 'scoped memory for xvector_trainer_forward.1']
    #allocation7 [shape = 'u8[524288]{0}', space=vmem, size = 0x80000, scoped, tag = 'input window, operand 1, single buffered']
    #allocation8 [shape = 's32[1]{0}', space=sflag, size = 0x4, scoped, tag = 'scoped memory for xvector_trainer_forward.1']
    #allocation9 [shape = 'u8[2048]{0}', space=vmem, size = 0x800, scoped, tag = 'input window, operand 2, single buffered']
    #allocation10 [shape = 'u8[2048]{0}', space=vmem, size = 0x800, scoped, tag = 'input window, operand 4, single buffered']
    #allocation11 [shape = 's32[1]{0}', space=sflag, size = 0x4, scoped, tag = 'scoped memory for xvector_trainer_forward.1']
    #allocation12 [shape = 'u8[524288]{0}', space=vmem, size = 0x80000, scoped, tag = 'output window, operand 0, single buffered']
    %10 = vsyncpa [#allocation5], 0
    %11 = vsyncpa [#allocation8], 0
    %12 = vsyncpa [#allocation11], 0
    %13 = vsyncpa [#allocation6], 0
    // Predicated region
    $region2: #{xvector_trainer_forward.1} parent=1 // pred_check
      _
    $region3: #{xvector_trainer_forward.1} parent=1 // pred_check_branch
      %15 = sbr.rel (0) target = $region5
    $region4: #{xvector_trainer_forward.1} parent=1 // pred_region
      %s17 = ssub.s32 16384, 16384
      %18 = vsyncadd [#allocation5], %s17
      %s19 = sshll.u32 [#allocation4], 4
      %s20 = int_to_ptr.vmem [resolvable:$true] %s19
      %25 = dma.hbm_to_vmem [thread:$0]  %s0, 16384, %s20, [#allocation5], 512, 512, 32
    $region5: #{xvector_trainer_forward.1} parent=1 // pred_fallthru
      _
    // Predicated region
    $region6: #{xvector_trainer_forward.1} parent=1 // pred_check
      _
    $region7: #{xvector_trainer_forward.1} parent=1 // pred_check_branch
      %27 = sbr.rel (0) target = $region9
    $region8: #{xvector_trainer_forward.1} parent=1 // pred_region
      %s29 = ssub.s32 16384, 16384
      %30 = vsyncadd [#allocation8], %s29
      %s31 = sshll.u32 [#allocation7], 4
      %s32 = int_to_ptr.vmem [resolvable:$true] %s31
      %37 = dma.hbm_to_vmem [thread:$0]  %s1, 16384, %s32, [#allocation8], 256, 256, 16
    $region9: #{xvector_trainer_forward.1} parent=1 // pred_fallthru
      _
    // Predicated region
    $region10: #{xvector_trainer_forward.1} parent=1 // pred_check
      _
    $region11: #{xvector_trainer_forward.1} parent=1 // pred_check_branch
      %39 = sbr.rel (0) target = $region13
    $region12: #{xvector_trainer_forward.1} parent=1 // pred_region
      %s41 = ssub.s32 64, 64
      %42 = vsyncadd [#allocation8], %s41
      %s44 = sshll.u32 [#allocation9], 4
      %s45 = int_to_ptr.vmem [resolvable:$true] %s44
      %47 = dma.hbm_to_vmem [thread:$0]  %s2, 64, %s45, [#allocation8]
    $region13: #{xvector_trainer_forward.1} parent=1 // pred_fallthru
      _
    // Predicated region
    $region14: #{xvector_trainer_forward.1} parent=1 // pred_check
      _
    $region15: #{xvector_trainer_forward.1} parent=1 // pred_check_branch
      %49 = sbr.rel (0) target = $region17
    $region16: #{xvector_trainer_forward.1} parent=1 // pred_region
      _
    $region17: #{xvector_trainer_forward.1} parent=1 // pred_fallthru
      _
    // Predicated region
    $region18: #{xvector_trainer_forward.1} parent=1 // pred_check
      _
    $region19: #{xvector_trainer_forward.1} parent=1 // pred_check_branch
      %51 = sbr.rel (0) target = $region21
    $region20: #{xvector_trainer_forward.1} parent=1 // pred_region
      %s53 = ssub.s32 64, 64
      %54 = vsyncadd [#allocation11], %s53
      %s56 = sshll.u32 [#allocation10], 4
      %s57 = int_to_ptr.vmem [resolvable:$true] %s56
      %59 = dma.hbm_to_vmem [thread:$0]  %s4, 64, %s57, [#allocation11]
    $region21: #{xvector_trainer_forward.1} parent=1 // pred_fallthru
      _
    // Predicated region
    $region22: #{xvector_trainer_forward.1} parent=1 // pred_check
      _
    $region23: #{xvector_trainer_forward.1} parent=1 // pred_check_branch
      %61 = sbr.rel (0) target = $region25
    $region24: #{xvector_trainer_forward.1} parent=1 // pred_region
      %62 = dma.done [#allocation5], 16384
    $region25: #{xvector_trainer_forward.1} parent=1 // pred_fallthru
      _
    // Predicated region
    $region26: #{xvector_trainer_forward.1} parent=1 // pred_check
      _
    $region27: #{xvector_trainer_forward.1} parent=1 // pred_check_branch
      %64 = sbr.rel (0) target = $region29
    $region28: #{xvector_trainer_forward.1} parent=1 // pred_region
      %65 = dma.done [#allocation8], 16384
    $region29: #{xvector_trainer_forward.1} parent=1 // pred_fallthru
      _
    // Predicated region
    $region30: #{xvector_trainer_forward.1} parent=1 // pred_check
      _
    $region31: #{xvector_trainer_forward.1} parent=1 // pred_check_branch
      %67 = sbr.rel (0) target = $region33
    $region32: #{xvector_trainer_forward.1} parent=1 // pred_region
      %68 = dma.done [#allocation8], 64
    $region33: #{xvector_trainer_forward.1} parent=1 // pred_fallthru
      _
    // Predicated region
    $region34: #{xvector_trainer_forward.1} parent=1 // pred_check
      _
    $region35: #{xvector_trainer_forward.1} parent=1 // pred_check_branch
      %70 = sbr.rel (0) target = $region37
    $region36: #{xvector_trainer_forward.1} parent=1 // pred_region
      %71 = dma.done [#allocation11], 64
    $region37: #{xvector_trainer_forward.1} parent=1 // pred_fallthru
      _
    %p72 = scmp.eq.s32.totalorder 0, 0
    // Predicated region
    $region38: #{xvector_trainer_forward.1} parent=1 // pred_check
      %p73 = pneg %p72
    $region39: #{xvector_trainer_forward.1} parent=1 // pred_check_branch
      %75 = sbr.rel (%p73) target = $region41
    $region40: #{xvector_trainer_forward.1} parent=1 // pred_region
      %v76 = vlaneseq
      %vm77 = vcmp.ge.s32.totalorder %v76, 0
      %vm78 = vcmp.lt.s32.totalorder %v76, 512
      %vm79 = vmand %vm77, %vm78
      %80 = vst.msk [vmem:[#allocation2] sm:$0xf] %vm79, 0.0
      %81 = vst.msk [vmem:[#allocation3] sm:$0xf] %vm79, 0.0
    $region41: #{xvector_trainer_forward.1} parent=1 // pred_fallthru
      _
    %v82 = vld [vmem:[#allocation4] sm:$0xff]
    %v83 = vld [vmem:[#allocation4 + $0x8] sm:$0xff]
    %v84 = vld [vmem:[#allocation4 + $0x10] sm:$0xff]
    %v85 = vld [vmem:[#allocation4 + $0x18] sm:$0xff]
    %v86 = vld [vmem:[#allocation4 + $0x20] sm:$0xff]
    %v87 = vld [vmem:[#allocation4 + $0x28] sm:$0xff]
    %v88 = vld [vmem:[#allocation4 + $0x30] sm:$0xff]
    %v89 = vld [vmem:[#allocation4 + $0x38] sm:$0xff]
    %v90 = vld [vmem:[#allocation4 + $0x40] sm:$0xff]
    %v91 = vld [vmem:[#allocation4 + $0x48] sm:$0xff]
    %v92 = vld [vmem:[#allocation4 + $0x50] sm:$0xff]
    %v93 = vld [vmem:[#allocation4 + $0x58] sm:$0xff]
    %v94 = vld [vmem:[#allocation4 + $0x60] sm:$0xff]
    %v95 = vld [vmem:[#allocation4 + $0x68] sm:$0xff]
    %v96 = vld [vmem:[#allocation4 + $0x70] sm:$0xff]
    %v97 = vld [vmem:[#allocation4 + $0x78] sm:$0xff]
    %v98 = vld [vmem:[#allocation4 + $0x80] sm:$0xff]
    %v99 = vld [vmem:[#allocation4 + $0x88] sm:$0xff]
    %v100 = vld [vmem:[#allocation4 + $0x90] sm:$0xff]
    %v101 = vld [vmem:[#allocation4 + $0x98] sm:$0xff]
    %v102 = vld [vmem:[#allocation4 + $0xa0] sm:$0xff]
    %v103 = vld [vmem:[#allocation4 + $0xa8] sm:$0xff]
    %v104 = vld [vmem:[#allocation4 + $0xb0] sm:$0xff]
    %v105 = vld [vmem:[#allocation4 + $0xb8] sm:$0xff]
    %v106 = vld [vmem:[#allocation4 + $0xc0] sm:$0xff]
    %v107 = vld [vmem:[#allocation4 + $0xc8] sm:$0xff]
    %v108 = vld [vmem:[#allocation4 + $0xd0] sm:$0xff]
    %v109 = vld [vmem:[#allocation4 + $0xd8] sm:$0xff]
    %v110 = vld [vmem:[#allocation4 + $0xe0] sm:$0xff]
    %v111 = vld [vmem:[#allocation4 + $0xe8] sm:$0xff]
    %v112 = vld [vmem:[#allocation4 + $0xf0] sm:$0xff]
    %v113 = vld [vmem:[#allocation4 + $0xf8] sm:$0xff]
    %v114 = vld [vmem:[#allocation4 + $0x100] sm:$0xff]
    %v115 = vld [vmem:[#allocation4 + $0x108] sm:$0xff]
    %v116 = vld [vmem:[#allocation4 + $0x110] sm:$0xff]
    %v117 = vld [vmem:[#allocation4 + $0x118] sm:$0xff]
    %v118 = vld [vmem:[#allocation4 + $0x120] sm:$0xff]
    %v119 = vld [vmem:[#allocation4 + $0x128] sm:$0xff]
    %v120 = vld [vmem:[#allocation4 + $0x130] sm:$0xff]
    %v121 = vld [vmem:[#allocation4 + $0x138] sm:$0xff]
    %v122 = vld [vmem:[#allocation4 + $0x140] sm:$0xff]
    %v123 = vld [vmem:[#allocation4 + $0x148] sm:$0xff]
    %v124 = vld [vmem:[#allocation4 + $0x150] sm:$0xff]
    %v125 = vld [vmem:[#allocation4 + $0x158] sm:$0xff]
    %v126 = vld [vmem:[#allocation4 + $0x160] sm:$0xff]
    %v127 = vld [vmem:[#allocation4 + $0x168] sm:$0xff]
    %v128 = vld [vmem:[#allocation4 + $0x170] sm:$0xff]
    %v129 = vld [vmem:[#allocation4 + $0x178] sm:$0xff]
    %v130 = vld [vmem:[#allocation4 + $0x180] sm:$0xff]
    %v131 = vld [vmem:[#allocation4 + $0x188] sm:$0xff]
    %v132 = vld [vmem:[#allocation4 + $0x190] sm:$0xff]
    %v133 = vld [vmem:[#allocation4 + $0x198] sm:$0xff]
    %v134 = vld [vmem:[#allocation4 + $0x1a0] sm:$0xff]
    %v135 = vld [vmem:[#allocation4 + $0x1a8] sm:$0xff]
    %v136 = vld [vmem:[#allocation4 + $0x1b0] sm:$0xff]
    %v137 = vld [vmem:[#allocation4 + $0x1b8] sm:$0xff]
    %v138 = vld [vmem:[#allocation4 + $0x1c0] sm:$0xff]
    %v139 = vld [vmem:[#allocation4 + $0x1c8] sm:$0xff]
    %v140 = vld [vmem:[#allocation4 + $0x1d0] sm:$0xff]
    %v141 = vld [vmem:[#allocation4 + $0x1d8] sm:$0xff]
    %v142 = vld [vmem:[#allocation4 + $0x1e0] sm:$0xff]
    %v143 = vld [vmem:[#allocation4 + $0x1e8] sm:$0xff]
    %v144 = vld [vmem:[#allocation4 + $0x1f0] sm:$0xff]
    %v145 = vld [vmem:[#allocation4 + $0x1f8] sm:$0xff]
    %v146 = vld [vmem:[#allocation4 + $0x200] sm:$0xff]
    %v147 = vld [vmem:[#allocation4 + $0x208] sm:$0xff]
    %v148 = vld [vmem:[#allocation4 + $0x210] sm:$0xff]
    %v149 = vld [vmem:[#allocation4 + $0x218] sm:$0xff]
    %v150 = vld [vmem:[#allocation4 + $0x220] sm:$0xff]
    %v151 = vld [vmem:[#allocation4 + $0x228] sm:$0xff]
    %v152 = vld [vmem:[#allocation4 + $0x230] sm:$0xff]
    %v153 = vld [vmem:[#allocation4 + $0x238] sm:$0xff]
    %v154 = vld [vmem:[#allocation4 + $0x240] sm:$0xff]
    %v155 = vld [vmem:[#allocation4 + $0x248] sm:$0xff]
    %v156 = vld [vmem:[#allocation4 + $0x250] sm:$0xff]
    %v157 = vld [vmem:[#allocation4 + $0x258] sm:$0xff]
    %v158 = vld [vmem:[#allocation4 + $0x260] sm:$0xff]
    %v159 = vld [vmem:[#allocation4 + $0x268] sm:$0xff]
    %v160 = vld [vmem:[#allocation4 + $0x270] sm:$0xff]
    %v161 = vld [vmem:[#allocation4 + $0x278] sm:$0xff]
    %v162 = vld [vmem:[#allocation4 + $0x280] sm:$0xff]
    %v163 = vld [vmem:[#allocation4 + $0x288] sm:$0xff]
    %v164 = vld [vmem:[#allocation4 + $0x290] sm:$0xff]
    %v165 = vld [vmem:[#allocation4 + $0x298] sm:$0xff]
    %v166 = vld [vmem:[#allocation4 + $0x2a0] sm:$0xff]
    %v167 = vld [vmem:[#allocation4 + $0x2a8] sm:$0xff]
    %v168 = vld [vmem:[#allocation4 + $0x2b0] sm:$0xff]
    %v169 = vld [vmem:[#allocation4 + $0x2b8] sm:$0xff]
    %v170 = vld [vmem:[#allocation4 + $0x2c0] sm:$0xff]
    %v171 = vld [vmem:[#allocation4 + $0x2c8] sm:$0xff]
    %v172 = vld [vmem:[#allocation4 + $0x2d0] sm:$0xff]
    %v173 = vld [vmem:[#allocation4 + $0x2d8] sm:$0xff]
    %v174 = vld [vmem:[#allocation4 + $0x2e0] sm:$0xff]
    %v175 = vld [vmem:[#allocation4 + $0x2e8] sm:$0xff]
    %v176 = vld [vmem:[#allocation4 + $0x2f0] sm:$0xff]
    %v177 = vld [vmem:[#allocation4 + $0x2f8] sm:$0xff]
    %v178 = vld [vmem:[#allocation4 + $0x300] sm:$0xff]
    %v179 = vld [vmem:[#allocation4 + $0x308] sm:$0xff]
    %v180 = vld [vmem:[#allocation4 + $0x310] sm:$0xff]
    %v181 = vld [vmem:[#allocation4 + $0x318] sm:$0xff]
    %v182 = vld [vmem:[#allocation4 + $0x320] sm:$0xff]
    %v183 = vld [vmem:[#allocation4 + $0x328] sm:$0xff]
    %v184 = vld [vmem:[#allocation4 + $0x330] sm:$0xff]
    %v185 = vld [vmem:[#allocation4 + $0x338] sm:$0xff]
    %v186 = vld [vmem:[#allocation4 + $0x340] sm:$0xff]
    %v187 = vld [vmem:[#allocation4 + $0x348] sm:$0xff]
    %v188 = vld [vmem:[#allocation4 + $0x350] sm:$0xff]
    %v189 = vld [vmem:[#allocation4 + $0x358] sm:$0xff]
    %v190 = vld [vmem:[#allocation4 + $0x360] sm:$0xff]
    %v191 = vld [vmem:[#allocation4 + $0x368] sm:$0xff]
    %v192 = vld [vmem:[#allocation4 + $0x370] sm:$0xff]
    %v193 = vld [vmem:[#allocation4 + $0x378] sm:$0xff]
    %v194 = vld [vmem:[#allocation4 + $0x380] sm:$0xff]
    %v195 = vld [vmem:[#allocation4 + $0x388] sm:$0xff]
    %v196 = vld [vmem:[#allocation4 + $0x390] sm:$0xff]
    %v197 = vld [vmem:[#allocation4 + $0x398] sm:$0xff]
    %v198 = vld [vmem:[#allocation4 + $0x3a0] sm:$0xff]
    %v199 = vld [vmem:[#allocation4 + $0x3a8] sm:$0xff]
    %v200 = vld [vmem:[#allocation4 + $0x3b0] sm:$0xff]
    %v201 = vld [vmem:[#allocation4 + $0x3b8] sm:$0xff]
    %v202 = vld [vmem:[#allocation4 + $0x3c0] sm:$0xff]
    %v203 = vld [vmem:[#allocation4 + $0x3c8] sm:$0xff]
    %v204 = vld [vmem:[#allocation4 + $0x3d0] sm:$0xff]
    %v205 = vld [vmem:[#allocation4 + $0x3d8] sm:$0xff]
    %v206 = vld [vmem:[#allocation4 + $0x3e0] sm:$0xff]
    %v207 = vld [vmem:[#allocation4 + $0x3e8] sm:$0xff]
    %v208 = vld [vmem:[#allocation4 + $0x3f0] sm:$0xff]
    %v209 = vld [vmem:[#allocation4 + $0x3f8] sm:$0xff]
    %v210 = vpack.c.bf16 %v86, %v82
    %v211 = vpack.c.bf16 %v87, %v83
    %v212 = vpack.c.bf16 %v88, %v84
    %v213 = vpack.c.bf16 %v89, %v85
    %v214 = vpack.c.bf16 %v94, %v90
    %v215 = vpack.c.bf16 %v95, %v91
    %v216 = vpack.c.bf16 %v96, %v92
    %v217 = vpack.c.bf16 %v97, %v93
    %v218 = vpack.c.bf16 %v102, %v98
    %v219 = vpack.c.bf16 %v103, %v99
    %v220 = vpack.c.bf16 %v104, %v100
    %v221 = vpack.c.bf16 %v105, %v101
    %v222 = vpack.c.bf16 %v110, %v106
    %v223 = vpack.c.bf16 %v111, %v107
    %v224 = vpack.c.bf16 %v112, %v108
    %v225 = vpack.c.bf16 %v113, %v109
    %v226 = vpack.c.bf16 %v118, %v114
    %v227 = vpack.c.bf16 %v119, %v115
    %v228 = vpack.c.bf16 %v120, %v116
    %v229 = vpack.c.bf16 %v121, %v117
    %v230 = vpack.c.bf16 %v126, %v122
    %v231 = vpack.c.bf16 %v127, %v123
    %v232 = vpack.c.bf16 %v128, %v124
    %v233 = vpack.c.bf16 %v129, %v125
    %v234 = vpack.c.bf16 %v134, %v130
    %v235 = vpack.c.bf16 %v135, %v131
    %v236 = vpack.c.bf16 %v136, %v132
    %v237 = vpack.c.bf16 %v137, %v133
    %v238 = vpack.c.bf16 %v142, %v138
    %v239 = vpack.c.bf16 %v143, %v139
    %v240 = vpack.c.bf16 %v144, %v140
    %v241 = vpack.c.bf16 %v145, %v141
    %v242 = vpack.c.bf16 %v150, %v146
    %v243 = vpack.c.bf16 %v151, %v147
    %v244 = vpack.c.bf16 %v152, %v148
    %v245 = vpack.c.bf16 %v153, %v149
    %v246 = vpack.c.bf16 %v158, %v154
    %v247 = vpack.c.bf16 %v159, %v155
    %v248 = vpack.c.bf16 %v160, %v156
    %v249 = vpack.c.bf16 %v161, %v157
    %v250 = vpack.c.bf16 %v166, %v162
    %v251 = vpack.c.bf16 %v167, %v163
    %v252 = vpack.c.bf16 %v168, %v164
    %v253 = vpack.c.bf16 %v169, %v165
    %v254 = vpack.c.bf16 %v174, %v170
    %v255 = vpack.c.bf16 %v175, %v171
    %v256 = vpack.c.bf16 %v176, %v172
    %v257 = vpack.c.bf16 %v177, %v173
    %v258 = vpack.c.bf16 %v182, %v178
    %v259 = vpack.c.bf16 %v183, %v179
    %v260 = vpack.c.bf16 %v184, %v180
    %v261 = vpack.c.bf16 %v185, %v181
    %v262 = vpack.c.bf16 %v190, %v186
    %v263 = vpack.c.bf16 %v191, %v187
    %v264 = vpack.c.bf16 %v192, %v188
    %v265 = vpack.c.bf16 %v193, %v189
    %v266 = vpack.c.bf16 %v198, %v194
    %v267 = vpack.c.bf16 %v199, %v195
    %v268 = vpack.c.bf16 %v200, %v196
    %v269 = vpack.c.bf16 %v201, %v197
    %v270 = vpack.c.bf16 %v206, %v202
    %v271 = vpack.c.bf16 %v207, %v203
    %v272 = vpack.c.bf16 %v208, %v204
    %v273 = vpack.c.bf16 %v209, %v205
    %v274 = vld [vmem:[#allocation7] sm:$0xff]
    %v275 = vld [vmem:[#allocation7 + $0x8] sm:$0xff]
    %v276 = vld [vmem:[#allocation7 + $0x10] sm:$0xff]
    %v277 = vld [vmem:[#allocation7 + $0x18] sm:$0xff]
    %v278 = vld [vmem:[#allocation7 + $0x20] sm:$0xff]
    %v279 = vld [vmem:[#allocation7 + $0x28] sm:$0xff]
    %v280 = vld [vmem:[#allocation7 + $0x30] sm:$0xff]
    %v281 = vld [vmem:[#allocation7 + $0x38] sm:$0xff]
    %v282 = vld [vmem:[#allocation7 + $0x40] sm:$0xff]
    %v283 = vld [vmem:[#allocation7 + $0x48] sm:$0xff]
    %v284 = vld [vmem:[#allocation7 + $0x50] sm:$0xff]
    %v285 = vld [vmem:[#allocation7 + $0x58] sm:$0xff]
    %v286 = vld [vmem:[#allocation7 + $0x60] sm:$0xff]
    %v287 = vld [vmem:[#allocation7 + $0x68] sm:$0xff]
    %v288 = vld [vmem:[#allocation7 + $0x70] sm:$0xff]
    %v289 = vld [vmem:[#allocation7 + $0x78] sm:$0xff]
    %v290 = vld [vmem:[#allocation7 + $0x80] sm:$0xff]
    %v291 = vld [vmem:[#allocation7 + $0x88] sm:$0xff]
    %v292 = vld [vmem:[#allocation7 + $0x90] sm:$0xff]
    %v293 = vld [vmem:[#allocation7 + $0x98] sm:$0xff]
    %v294 = vld [vmem:[#allocation7 + $0xa0] sm:$0xff]
    %v295 = vld [vmem:[#allocation7 + $0xa8] sm:$0xff]
    %v296 = vld [vmem:[#allocation7 + $0xb0] sm:$0xff]
    %v297 = vld [vmem:[#allocation7 + $0xb8] sm:$0xff]
    %v298 = vld [vmem:[#allocation7 + $0xc0] sm:$0xff]
    %v299 = vld [vmem:[#allocation7 + $0xc8] sm:$0xff]
    %v300 = vld [vmem:[#allocation7 + $0xd0] sm:$0xff]
    %v301 = vld [vmem:[#allocation7 + $0xd8] sm:$0xff]
    %v302 = vld [vmem:[#allocation7 + $0xe0] sm:$0xff]
    %v303 = vld [vmem:[#allocation7 + $0xe8] sm:$0xff]
    %v304 = vld [vmem:[#allocation7 + $0xf0] sm:$0xff]
    %v305 = vld [vmem:[#allocation7 + $0xf8] sm:$0xff]
    %v306 = vld [vmem:[#allocation7 + $0x100] sm:$0xff]
    %v307 = vld [vmem:[#allocation7 + $0x108] sm:$0xff]
    %v308 = vld [vmem:[#allocation7 + $0x110] sm:$0xff]
    %v309 = vld [vmem:[#allocation7 + $0x118] sm:$0xff]
    %v310 = vld [vmem:[#allocation7 + $0x120] sm:$0xff]
    %v311 = vld [vmem:[#allocation7 + $0x128] sm:$0xff]
    %v312 = vld [vmem:[#allocation7 + $0x130] sm:$0xff]
    %v313 = vld [vmem:[#allocation7 + $0x138] sm:$0xff]
    %v314 = vld [vmem:[#allocation7 + $0x140] sm:$0xff]
    %v315 = vld [vmem:[#allocation7 + $0x148] sm:$0xff]
    %v316 = vld [vmem:[#allocation7 + $0x150] sm:$0xff]
    %v317 = vld [vmem:[#allocation7 + $0x158] sm:$0xff]
    %v318 = vld [vmem:[#allocation7 + $0x160] sm:$0xff]
    %v319 = vld [vmem:[#allocation7 + $0x168] sm:$0xff]
    %v320 = vld [vmem:[#allocation7 + $0x170] sm:$0xff]
    %v321 = vld [vmem:[#allocation7 + $0x178] sm:$0xff]
    %v322 = vld [vmem:[#allocation7 + $0x180] sm:$0xff]
    %v323 = vld [vmem:[#allocation7 + $0x188] sm:$0xff]
    %v324 = vld [vmem:[#allocation7 + $0x190] sm:$0xff]
    %v325 = vld [vmem:[#allocation7 + $0x198] sm:$0xff]
    %v326 = vld [vmem:[#allocation7 + $0x1a0] sm:$0xff]
    %v327 = vld [vmem:[#allocation7 + $0x1a8] sm:$0xff]
    %v328 = vld [vmem:[#allocation7 + $0x1b0] sm:$0xff]
    %v329 = vld [vmem:[#allocation7 + $0x1b8] sm:$0xff]
    %v330 = vld [vmem:[#allocation7 + $0x1c0] sm:$0xff]
    %v331 = vld [vmem:[#allocation7 + $0x1c8] sm:$0xff]
    %v332 = vld [vmem:[#allocation7 + $0x1d0] sm:$0xff]
    %v333 = vld [vmem:[#allocation7 + $0x1d8] sm:$0xff]
    %v334 = vld [vmem:[#allocation7 + $0x1e0] sm:$0xff]
    %v335 = vld [vmem:[#allocation7 + $0x1e8] sm:$0xff]
    %v336 = vld [vmem:[#allocation7 + $0x1f0] sm:$0xff]
    %v337 = vld [vmem:[#allocation7 + $0x1f8] sm:$0xff]
    %v338 = vld [vmem:[#allocation7 + $0x200] sm:$0xff]
    %v339 = vld [vmem:[#allocation7 + $0x208] sm:$0xff]
    %v340 = vld [vmem:[#allocation7 + $0x210] sm:$0xff]
    %v341 = vld [vmem:[#allocation7 + $0x218] sm:$0xff]
    %v342 = vld [vmem:[#allocation7 + $0x220] sm:$0xff]
    %v343 = vld [vmem:[#allocation7 + $0x228] sm:$0xff]
    %v344 = vld [vmem:[#allocation7 + $0x230] sm:$0xff]
    %v345 = vld [vmem:[#allocation7 + $0x238] sm:$0xff]
    %v346 = vld [vmem:[#allocation7 + $0x240] sm:$0xff]
    %v347 = vld [vmem:[#allocation7 + $0x248] sm:$0xff]
    %v348 = vld [vmem:[#allocation7 + $0x250] sm:$0xff]
    %v349 = vld [vmem:[#allocation7 + $0x258] sm:$0xff]
    %v350 = vld [vmem:[#allocation7 + $0x260] sm:$0xff]
    %v351 = vld [vmem:[#allocation7 + $0x268] sm:$0xff]
    %v352 = vld [vmem:[#allocation7 + $0x270] sm:$0xff]
    %v353 = vld [vmem:[#allocation7 + $0x278] sm:$0xff]
    %v354 = vld [vmem:[#allocation7 + $0x280] sm:$0xff]
    %v355 = vld [vmem:[#allocation7 + $0x288] sm:$0xff]
    %v356 = vld [vmem:[#allocation7 + $0x290] sm:$0xff]
    %v357 = vld [vmem:[#allocation7 + $0x298] sm:$0xff]
    %v358 = vld [vmem:[#allocation7 + $0x2a0] sm:$0xff]
    %v359 = vld [vmem:[#allocation7 + $0x2a8] sm:$0xff]
    %v360 = vld [vmem:[#allocation7 + $0x2b0] sm:$0xff]
    %v361 = vld [vmem:[#allocation7 + $0x2b8] sm:$0xff]
    %v362 = vld [vmem:[#allocation7 + $0x2c0] sm:$0xff]
    %v363 = vld [vmem:[#allocation7 + $0x2c8] sm:$0xff]
    %v364 = vld [vmem:[#allocation7 + $0x2d0] sm:$0xff]
    %v365 = vld [vmem:[#allocation7 + $0x2d8] sm:$0xff]
    %v366 = vld [vmem:[#allocation7 + $0x2e0] sm:$0xff]
    %v367 = vld [vmem:[#allocation7 + $0x2e8] sm:$0xff]
    %v368 = vld [vmem:[#allocation7 + $0x2f0] sm:$0xff]
    %v369 = vld [vmem:[#allocation7 + $0x2f8] sm:$0xff]
    %v370 = vld [vmem:[#allocation7 + $0x300] sm:$0xff]
    %v371 = vld [vmem:[#allocation7 + $0x308] sm:$0xff]
    %v372 = vld [vmem:[#allocation7 + $0x310] sm:$0xff]
    %v373 = vld [vmem:[#allocation7 + $0x318] sm:$0xff]
    %v374 = vld [vmem:[#allocation7 + $0x320] sm:$0xff]
    %v375 = vld [vmem:[#allocation7 + $0x328] sm:$0xff]
    %v376 = vld [vmem:[#allocation7 + $0x330] sm:$0xff]
    %v377 = vld [vmem:[#allocation7 + $0x338] sm:$0xff]
    %v378 = vld [vmem:[#allocation7 + $0x340] sm:$0xff]
    %v379 = vld [vmem:[#allocation7 + $0x348] sm:$0xff]
    %v380 = vld [vmem:[#allocation7 + $0x350] sm:$0xff]
    %v381 = vld [vmem:[#allocation7 + $0x358] sm:$0xff]
    %v382 = vld [vmem:[#allocation7 + $0x360] sm:$0xff]
    %v383 = vld [vmem:[#allocation7 + $0x368] sm:$0xff]
    %v384 = vld [vmem:[#allocation7 + $0x370] sm:$0xff]
    %v385 = vld [vmem:[#allocation7 + $0x378] sm:$0xff]
    %v386 = vld [vmem:[#allocation7 + $0x380] sm:$0xff]
    %v387 = vld [vmem:[#allocation7 + $0x388] sm:$0xff]
    %v388 = vld [vmem:[#allocation7 + $0x390] sm:$0xff]
    %v389 = vld [vmem:[#allocation7 + $0x398] sm:$0xff]
    %v390 = vld [vmem:[#allocation7 + $0x3a0] sm:$0xff]
    %v391 = vld [vmem:[#allocation7 + $0x3a8] sm:$0xff]
    %v392 = vld [vmem:[#allocation7 + $0x3b0] sm:$0xff]
    %v393 = vld [vmem:[#allocation7 + $0x3b8] sm:$0xff]
    %v394 = vld [vmem:[#allocation7 + $0x3c0] sm:$0xff]
    %v395 = vld [vmem:[#allocation7 + $0x3c8] sm:$0xff]
    %v396 = vld [vmem:[#allocation7 + $0x3d0] sm:$0xff]
    %v397 = vld [vmem:[#allocation7 + $0x3d8] sm:$0xff]
    %v398 = vld [vmem:[#allocation7 + $0x3e0] sm:$0xff]
    %v399 = vld [vmem:[#allocation7 + $0x3e8] sm:$0xff]
    %v400 = vld [vmem:[#allocation7 + $0x3f0] sm:$0xff]
    %v401 = vld [vmem:[#allocation7 + $0x3f8] sm:$0xff]
    %v402 = vld [vmem:[#allocation9] sm:$0xf]
    %v404 = vlaneseq
    %v405 = vshrl.u32 %v404, 7
    %v406 = vsub.s32 0, %v405
    %v407 = vrot.slane %v402, %v406
    %v408 = vlaneseq
    %v409 = vshrl.u32 %v408, 7
    %v410 = vsub.s32 1, %v409
    %v411 = vrot.slane %v402, %v410
    %v412 = vlaneseq
    %v413 = vshrl.u32 %v412, 7
    %v414 = vsub.s32 2, %v413
    %v415 = vrot.slane %v402, %v414
    %v416 = vlaneseq
    %v417 = vshrl.u32 %v416, 7
    %v418 = vsub.s32 3, %v417
    %v419 = vrot.slane %v402, %v418
    %v552 = vunpack.c.l.b16 %v274
    %v553 = vunpack.c.h.b16 %v274
    %v554 = vunpack.c.l.b16 %v275
    %v555 = vunpack.c.h.b16 %v275
    %v556 = vunpack.c.l.b16 %v276
    %v557 = vunpack.c.h.b16 %v276
    %v558 = vunpack.c.l.b16 %v277
    %v559 = vunpack.c.h.b16 %v277
    %v560 = vunpack.c.l.b16 %v278
    %v561 = vunpack.c.h.b16 %v278
    %v562 = vunpack.c.l.b16 %v279
    %v563 = vunpack.c.h.b16 %v279
    %v564 = vunpack.c.l.b16 %v280
    %v565 = vunpack.c.h.b16 %v280
    %v566 = vunpack.c.l.b16 %v281
    %v567 = vunpack.c.h.b16 %v281
    %v568 = vunpack.c.l.b16 %v282
    %v569 = vunpack.c.h.b16 %v282
    %v570 = vunpack.c.l.b16 %v283
    %v571 = vunpack.c.h.b16 %v283
    %v572 = vunpack.c.l.b16 %v284
    %v573 = vunpack.c.h.b16 %v284
    %v574 = vunpack.c.l.b16 %v285
    %v575 = vunpack.c.h.b16 %v285
    %v576 = vunpack.c.l.b16 %v286
    %v577 = vunpack.c.h.b16 %v286
    %v578 = vunpack.c.l.b16 %v287
    %v579 = vunpack.c.h.b16 %v287
    %v580 = vunpack.c.l.b16 %v288
    %v581 = vunpack.c.h.b16 %v288
    %v582 = vunpack.c.l.b16 %v289
    %v583 = vunpack.c.h.b16 %v289
    %v584 = vunpack.c.l.b16 %v290
    %v585 = vunpack.c.h.b16 %v290
    %v586 = vunpack.c.l.b16 %v291
    %v587 = vunpack.c.h.b16 %v291
    %v588 = vunpack.c.l.b16 %v292
    %v589 = vunpack.c.h.b16 %v292
    %v590 = vunpack.c.l.b16 %v293
    %v591 = vunpack.c.h.b16 %v293
    %v592 = vunpack.c.l.b16 %v294
    %v593 = vunpack.c.h.b16 %v294
    %v594 = vunpack.c.l.b16 %v295
    %v595 = vunpack.c.h.b16 %v295
    %v596 = vunpack.c.l.b16 %v296
    %v597 = vunpack.c.h.b16 %v296
    %v598 = vunpack.c.l.b16 %v297
    %v599 = vunpack.c.h.b16 %v297
    %v600 = vunpack.c.l.b16 %v298
    %v601 = vunpack.c.h.b16 %v298
    %v602 = vunpack.c.l.b16 %v299
    %v603 = vunpack.c.h.b16 %v299
    %v604 = vunpack.c.l.b16 %v300
    %v605 = vunpack.c.h.b16 %v300
    %v606 = vunpack.c.l.b16 %v301
    %v607 = vunpack.c.h.b16 %v301
    %v608 = vunpack.c.l.b16 %v302
    %v609 = vunpack.c.h.b16 %v302
    %v610 = vunpack.c.l.b16 %v303
    %v611 = vunpack.c.h.b16 %v303
    %v612 = vunpack.c.l.b16 %v304
    %v613 = vunpack.c.h.b16 %v304
    %v614 = vunpack.c.l.b16 %v305
    %v615 = vunpack.c.h.b16 %v305
    %v616 = vunpack.c.l.b16 %v306
    %v617 = vunpack.c.h.b16 %v306
    %v618 = vunpack.c.l.b16 %v307
    %v619 = vunpack.c.h.b16 %v307
    %v620 = vunpack.c.l.b16 %v308
    %v621 = vunpack.c.h.b16 %v308
    %v622 = vunpack.c.l.b16 %v309
    %v623 = vunpack.c.h.b16 %v309
    %v624 = vunpack.c.l.b16 %v310
    %v625 = vunpack.c.h.b16 %v310
    %v626 = vunpack.c.l.b16 %v311
    %v627 = vunpack.c.h.b16 %v311
    %v628 = vunpack.c.l.b16 %v312
    %v629 = vunpack.c.h.b16 %v312
    %v630 = vunpack.c.l.b16 %v313
    %v631 = vunpack.c.h.b16 %v313
    %v632 = vunpack.c.l.b16 %v314
    %v633 = vunpack.c.h.b16 %v314
    %v634 = vunpack.c.l.b16 %v315
    %v635 = vunpack.c.h.b16 %v315
    %v636 = vunpack.c.l.b16 %v316
    %v637 = vunpack.c.h.b16 %v316
    %v638 = vunpack.c.l.b16 %v317
    %v639 = vunpack.c.h.b16 %v317
    %v640 = vunpack.c.l.b16 %v318
    %v641 = vunpack.c.h.b16 %v318
    %v642 = vunpack.c.l.b16 %v319
    %v643 = vunpack.c.h.b16 %v319
    %v644 = vunpack.c.l.b16 %v320
    %v645 = vunpack.c.h.b16 %v320
    %v646 = vunpack.c.l.b16 %v321
    %v647 = vunpack.c.h.b16 %v321
    %v648 = vunpack.c.l.b16 %v322
    %v649 = vunpack.c.h.b16 %v322
    %v650 = vunpack.c.l.b16 %v323
    %v651 = vunpack.c.h.b16 %v323
    %v652 = vunpack.c.l.b16 %v324
    %v653 = vunpack.c.h.b16 %v324
    %v654 = vunpack.c.l.b16 %v325
    %v655 = vunpack.c.h.b16 %v325
    %v656 = vunpack.c.l.b16 %v326
    %v657 = vunpack.c.h.b16 %v326
    %v658 = vunpack.c.l.b16 %v327
    %v659 = vunpack.c.h.b16 %v327
    %v660 = vunpack.c.l.b16 %v328
    %v661 = vunpack.c.h.b16 %v328
    %v662 = vunpack.c.l.b16 %v329
    %v663 = vunpack.c.h.b16 %v329
    %v664 = vunpack.c.l.b16 %v330
    %v665 = vunpack.c.h.b16 %v330
    %v666 = vunpack.c.l.b16 %v331
    %v667 = vunpack.c.h.b16 %v331
    %v668 = vunpack.c.l.b16 %v332
    %v669 = vunpack.c.h.b16 %v332
    %v670 = vunpack.c.l.b16 %v333
    %v671 = vunpack.c.h.b16 %v333
    %v672 = vunpack.c.l.b16 %v334
    %v673 = vunpack.c.h.b16 %v334
    %v674 = vunpack.c.l.b16 %v335
    %v675 = vunpack.c.h.b16 %v335
    %v676 = vunpack.c.l.b16 %v336
    %v677 = vunpack.c.h.b16 %v336
    %v678 = vunpack.c.l.b16 %v337
    %v679 = vunpack.c.h.b16 %v337
    %v680 = vunpack.c.l.b16 %v338
    %v681 = vunpack.c.h.b16 %v338
    %v682 = vunpack.c.l.b16 %v339
    %v683 = vunpack.c.h.b16 %v339
    %v684 = vunpack.c.l.b16 %v340
    %v685 = vunpack.c.h.b16 %v340
    %v686 = vunpack.c.l.b16 %v341
    %v687 = vunpack.c.h.b16 %v341
    %v688 = vunpack.c.l.b16 %v342
    %v689 = vunpack.c.h.b16 %v342
    %v690 = vunpack.c.l.b16 %v343
    %v691 = vunpack.c.h.b16 %v343
    %v692 = vunpack.c.l.b16 %v344
    %v693 = vunpack.c.h.b16 %v344
    %v694 = vunpack.c.l.b16 %v345
    %v695 = vunpack.c.h.b16 %v345
    %v696 = vunpack.c.l.b16 %v346
    %v697 = vunpack.c.h.b16 %v346
    %v698 = vunpack.c.l.b16 %v347
    %v699 = vunpack.c.h.b16 %v347
    %v700 = vunpack.c.l.b16 %v348
    %v701 = vunpack.c.h.b16 %v348
    %v702 = vunpack.c.l.b16 %v349
    %v703 = vunpack.c.h.b16 %v349
    %v704 = vunpack.c.l.b16 %v350
    %v705 = vunpack.c.h.b16 %v350
    %v706 = vunpack.c.l.b16 %v351
    %v707 = vunpack.c.h.b16 %v351
    %v708 = vunpack.c.l.b16 %v352
    %v709 = vunpack.c.h.b16 %v352
    %v710 = vunpack.c.l.b16 %v353
    %v711 = vunpack.c.h.b16 %v353
    %v712 = vunpack.c.l.b16 %v354
    %v713 = vunpack.c.h.b16 %v354
    %v714 = vunpack.c.l.b16 %v355
    %v715 = vunpack.c.h.b16 %v355
    %v716 = vunpack.c.l.b16 %v356
    %v717 = vunpack.c.h.b16 %v356
    %v718 = vunpack.c.l.b16 %v357
    %v719 = vunpack.c.h.b16 %v357
    %v720 = vunpack.c.l.b16 %v358
    %v721 = vunpack.c.h.b16 %v358
    %v722 = vunpack.c.l.b16 %v359
    %v723 = vunpack.c.h.b16 %v359
    %v724 = vunpack.c.l.b16 %v360
    %v725 = vunpack.c.h.b16 %v360
    %v726 = vunpack.c.l.b16 %v361
    %v727 = vunpack.c.h.b16 %v361
    %v728 = vunpack.c.l.b16 %v362
    %v729 = vunpack.c.h.b16 %v362
    %v730 = vunpack.c.l.b16 %v363
    %v731 = vunpack.c.h.b16 %v363
    %v732 = vunpack.c.l.b16 %v364
    %v733 = vunpack.c.h.b16 %v364
    %v734 = vunpack.c.l.b16 %v365
    %v735 = vunpack.c.h.b16 %v365
    %v736 = vunpack.c.l.b16 %v366
    %v737 = vunpack.c.h.b16 %v366
    %v738 = vunpack.c.l.b16 %v367
    %v739 = vunpack.c.h.b16 %v367
    %v740 = vunpack.c.l.b16 %v368
    %v741 = vunpack.c.h.b16 %v368
    %v742 = vunpack.c.l.b16 %v369
    %v743 = vunpack.c.h.b16 %v369
    %v744 = vunpack.c.l.b16 %v370
    %v745 = vunpack.c.h.b16 %v370
    %v746 = vunpack.c.l.b16 %v371
    %v747 = vunpack.c.h.b16 %v371
    %v748 = vunpack.c.l.b16 %v372
    %v749 = vunpack.c.h.b16 %v372
    %v750 = vunpack.c.l.b16 %v373
    %v751 = vunpack.c.h.b16 %v373
    %v752 = vunpack.c.l.b16 %v374
    %v753 = vunpack.c.h.b16 %v374
    %v754 = vunpack.c.l.b16 %v375
    %v755 = vunpack.c.h.b16 %v375
    %v756 = vunpack.c.l.b16 %v376
    %v757 = vunpack.c.h.b16 %v376
    %v758 = vunpack.c.l.b16 %v377
    %v759 = vunpack.c.h.b16 %v377
    %v760 = vunpack.c.l.b16 %v378
    %v761 = vunpack.c.h.b16 %v378
    %v762 = vunpack.c.l.b16 %v379
    %v763 = vunpack.c.h.b16 %v379
    %v764 = vunpack.c.l.b16 %v380
    %v765 = vunpack.c.h.b16 %v380
    %v766 = vunpack.c.l.b16 %v381
    %v767 = vunpack.c.h.b16 %v381
    %v768 = vunpack.c.l.b16 %v382
    %v769 = vunpack.c.h.b16 %v382
    %v770 = vunpack.c.l.b16 %v383
    %v771 = vunpack.c.h.b16 %v383
    %v772 = vunpack.c.l.b16 %v384
    %v773 = vunpack.c.h.b16 %v384
    %v774 = vunpack.c.l.b16 %v385
    %v775 = vunpack.c.h.b16 %v385
    %v776 = vunpack.c.l.b16 %v386
    %v777 = vunpack.c.h.b16 %v386
    %v778 = vunpack.c.l.b16 %v387
    %v779 = vunpack.c.h.b16 %v387
    %v780 = vunpack.c.l.b16 %v388
    %v781 = vunpack.c.h.b16 %v388
    %v782 = vunpack.c.l.b16 %v389
    %v783 = vunpack.c.h.b16 %v389
    %v784 = vunpack.c.l.b16 %v390
    %v785 = vunpack.c.h.b16 %v390
    %v786 = vunpack.c.l.b16 %v391
    %v787 = vunpack.c.h.b16 %v391
    %v788 = vunpack.c.l.b16 %v392
    %v789 = vunpack.c.h.b16 %v392
    %v790 = vunpack.c.l.b16 %v393
    %v791 = vunpack.c.h.b16 %v393
    %v792 = vunpack.c.l.b16 %v394
    %v793 = vunpack.c.h.b16 %v394
    %v794 = vunpack.c.l.b16 %v395
    %v795 = vunpack.c.h.b16 %v395
    %v796 = vunpack.c.l.b16 %v396
    %v797 = vunpack.c.h.b16 %v396
    %v798 = vunpack.c.l.b16 %v397
    %v799 = vunpack.c.h.b16 %v397
    %v800 = vunpack.c.l.b16 %v398
    %v801 = vunpack.c.h.b16 %v398
    %v802 = vunpack.c.l.b16 %v399
    %v803 = vunpack.c.h.b16 %v399
    %v804 = vunpack.c.l.b16 %v400
    %v805 = vunpack.c.h.b16 %v400
    %v806 = vunpack.c.l.b16 %v401
    %v807 = vunpack.c.h.b16 %v401
    %v808 = vpack.c.b16 %v556, %v552
    %v809 = vpack.c.b16 %v557, %v553
    %v810 = vpack.c.b16 %v558, %v554
    %v811 = vpack.c.b16 %v559, %v555
    %v812 = vpack.c.b16 %v564, %v560
    %v813 = vpack.c.b16 %v565, %v561
    %v814 = vpack.c.b16 %v566, %v562
    %v815 = vpack.c.b16 %v567, %v563
    %v816 = vpack.c.b16 %v572, %v568
    %v817 = vpack.c.b16 %v573, %v569
    %v818 = vpack.c.b16 %v574, %v570
    %v819 = vpack.c.b16 %v575, %v571
    %v820 = vpack.c.b16 %v580, %v576
    %v821 = vpack.c.b16 %v581, %v577
    %v822 = vpack.c.b16 %v582, %v578
    %v823 = vpack.c.b16 %v583, %v579
    %v824 = vpack.c.b16 %v588, %v584
    %v825 = vpack.c.b16 %v589, %v585
    %v826 = vpack.c.b16 %v590, %v586
    %v827 = vpack.c.b16 %v591, %v587
    %v828 = vpack.c.b16 %v596, %v592
    %v829 = vpack.c.b16 %v597, %v593
    %v830 = vpack.c.b16 %v598, %v594
    %v831 = vpack.c.b16 %v599, %v595
    %v832 = vpack.c.b16 %v604, %v600
    %v833 = vpack.c.b16 %v605, %v601
    %v834 = vpack.c.b16 %v606, %v602
    %v835 = vpack.c.b16 %v607, %v603
    %v836 = vpack.c.b16 %v612, %v608
    %v837 = vpack.c.b16 %v613, %v609
    %v838 = vpack.c.b16 %v614, %v610
    %v839 = vpack.c.b16 %v615, %v611
    %v840 = vpack.c.b16 %v620, %v616
    %v841 = vpack.c.b16 %v621, %v617
    %v842 = vpack.c.b16 %v622, %v618
    %v843 = vpack.c.b16 %v623, %v619
    %v844 = vpack.c.b16 %v628, %v624
    %v845 = vpack.c.b16 %v629, %v625
    %v846 = vpack.c.b16 %v630, %v626
    %v847 = vpack.c.b16 %v631, %v627
    %v848 = vpack.c.b16 %v636, %v632
    %v849 = vpack.c.b16 %v637, %v633
    %v850 = vpack.c.b16 %v638, %v634
    %v851 = vpack.c.b16 %v639, %v635
    %v852 = vpack.c.b16 %v644, %v640
    %v853 = vpack.c.b16 %v645, %v641
    %v854 = vpack.c.b16 %v646, %v642
    %v855 = vpack.c.b16 %v647, %v643
    %v856 = vpack.c.b16 %v652, %v648
    %v857 = vpack.c.b16 %v653, %v649
    %v858 = vpack.c.b16 %v654, %v650
    %v859 = vpack.c.b16 %v655, %v651
    %v860 = vpack.c.b16 %v660, %v656
    %v861 = vpack.c.b16 %v661, %v657
    %v862 = vpack.c.b16 %v662, %v658
    %v863 = vpack.c.b16 %v663, %v659
    %v864 = vpack.c.b16 %v668, %v664
    %v865 = vpack.c.b16 %v669, %v665
    %v866 = vpack.c.b16 %v670, %v666
    %v867 = vpack.c.b16 %v671, %v667
    %v868 = vpack.c.b16 %v676, %v672
    %v869 = vpack.c.b16 %v677, %v673
    %v870 = vpack.c.b16 %v678, %v674
    %v871 = vpack.c.b16 %v679, %v675
    %v872 = vpack.c.b16 %v684, %v680
    %v873 = vpack.c.b16 %v685, %v681
    %v874 = vpack.c.b16 %v686, %v682
    %v875 = vpack.c.b16 %v687, %v683
    %v876 = vpack.c.b16 %v692, %v688
    %v877 = vpack.c.b16 %v693, %v689
    %v878 = vpack.c.b16 %v694, %v690
    %v879 = vpack.c.b16 %v695, %v691
    %v880 = vpack.c.b16 %v700, %v696
    %v881 = vpack.c.b16 %v701, %v697
    %v882 = vpack.c.b16 %v702, %v698
    %v883 = vpack.c.b16 %v703, %v699
    %v884 = vpack.c.b16 %v708, %v704
    %v885 = vpack.c.b16 %v709, %v705
    %v886 = vpack.c.b16 %v710, %v706
    %v887 = vpack.c.b16 %v711, %v707
    %v888 = vpack.c.b16 %v716, %v712
    %v889 = vpack.c.b16 %v717, %v713
    %v890 = vpack.c.b16 %v718, %v714
    %v891 = vpack.c.b16 %v719, %v715
    %v892 = vpack.c.b16 %v724, %v720
    %v893 = vpack.c.b16 %v725, %v721
    %v894 = vpack.c.b16 %v726, %v722
    %v895 = vpack.c.b16 %v727, %v723
    %v896 = vpack.c.b16 %v732, %v728
    %v897 = vpack.c.b16 %v733, %v729
    %v898 = vpack.c.b16 %v734, %v730
    %v899 = vpack.c.b16 %v735, %v731
    %v900 = vpack.c.b16 %v740, %v736
    %v901 = vpack.c.b16 %v741, %v737
    %v902 = vpack.c.b16 %v742, %v738
    %v903 = vpack.c.b16 %v743, %v739
    %v904 = vpack.c.b16 %v748, %v744
    %v905 = vpack.c.b16 %v749, %v745
    %v906 = vpack.c.b16 %v750, %v746
    %v907 = vpack.c.b16 %v751, %v747
    %v908 = vpack.c.b16 %v756, %v752
    %v909 = vpack.c.b16 %v757, %v753
    %v910 = vpack.c.b16 %v758, %v754
    %v911 = vpack.c.b16 %v759, %v755
    %v912 = vpack.c.b16 %v764, %v760
    %v913 = vpack.c.b16 %v765, %v761
    %v914 = vpack.c.b16 %v766, %v762
    %v915 = vpack.c.b16 %v767, %v763
    %v916 = vpack.c.b16 %v772, %v768
    %v917 = vpack.c.b16 %v773, %v769
    %v918 = vpack.c.b16 %v774, %v770
    %v919 = vpack.c.b16 %v775, %v771
    %v920 = vpack.c.b16 %v780, %v776
    %v921 = vpack.c.b16 %v781, %v777
    %v922 = vpack.c.b16 %v782, %v778
    %v923 = vpack.c.b16 %v783, %v779
    %v924 = vpack.c.b16 %v788, %v784
    %v925 = vpack.c.b16 %v789, %v785
    %v926 = vpack.c.b16 %v790, %v786
    %v927 = vpack.c.b16 %v791, %v787
    %v928 = vpack.c.b16 %v796, %v792
    %v929 = vpack.c.b16 %v797, %v793
    %v930 = vpack.c.b16 %v798, %v794
    %v931 = vpack.c.b16 %v799, %v795
    %v932 = vpack.c.b16 %v804, %v800
    %v933 = vpack.c.b16 %v805, %v801
    %v934 = vpack.c.b16 %v806, %v802
    %v935 = vpack.c.b16 %v807, %v803
    %1064 = vmatprep.subr.bf16.mxu0 %v837
    %1065 = vmatpush1.bf16.msra.mxu0 %v836
    %1066 = vmatprep.subr.bf16.mxu0 %v833
    %1067 = vmatpush1.bf16.msra.mxu0 %v832
    %1068 = vmatprep.subr.bf16.mxu0 %v829
    %1069 = vmatpush1.bf16.msra.mxu0 %v828
    %1070 = vmatprep.subr.bf16.mxu0 %v825
    %1071 = vmatpush1.bf16.msra.mxu0 %v824
    %1072 = vmatprep.subr.bf16.mxu0 %v821
    %1073 = vmatpush1.bf16.msra.mxu0 %v820
    %1074 = vmatprep.subr.bf16.mxu0 %v817
    %1075 = vmatpush1.bf16.msra.mxu0 %v816
    %1076 = vmatprep.subr.bf16.mxu0 %v813
    %1077 = vmatpush1.bf16.msra.mxu0 %v812
    %1078 = vmatprep.subr.bf16.mxu0 %v809
    %1079 = vmatpush1.bf16.msra.mxu0 %v808
    %1080 = vmatprep.subr.bf16.mxu0 %v869
    %1081 = vmatpush2.bf16.msra.mxu0 %v868
    %1082 = vmatprep.subr.bf16.mxu0 %v865
    %1083 = vmatpush2.bf16.msra.mxu0 %v864
    %1084 = vmatprep.subr.bf16.mxu0 %v861
    %1085 = vmatpush2.bf16.msra.mxu0 %v860
    %1086 = vmatprep.subr.bf16.mxu0 %v857
    %1087 = vmatpush2.bf16.msra.mxu0 %v856
    %1088 = vmatprep.subr.bf16.mxu0 %v853
    %1089 = vmatpush2.bf16.msra.mxu0 %v852
    %1090 = vmatprep.subr.bf16.mxu0 %v849
    %1091 = vmatpush2.bf16.msra.mxu0 %v848
    %1092 = vmatprep.subr.bf16.mxu0 %v845
    %1093 = vmatpush2.bf16.msra.mxu0 %v844
    %1094 = vmatprep.subr.bf16.mxu0 %v841
    %1095 = vmatpush2.bf16.msra.mxu0 %v840
    %1096 = vmatprep.mubr.bf16.mxu0 %v211
    %1097 = vmatmul.mubr.bf16.gmra.mxu0 %v210
    %v1098 = vpop.f32.mrf.mxu0
    %v1099 = vadd.f32 %v407, %v1098
    %v1100 = vpop.f32.mrf.mxu0
    %v1101 = vadd.f32 %v411, %v1100
    %v1102 = vpop.f32.mrf.mxu0
    %v1103 = vadd.f32 %v407, %v1102
    %v1104 = vpop.f32.mrf.mxu0
    %v1105 = vadd.f32 %v411, %v1104
    %1106 = vmatprep.mubr.bf16.mxu0 %v215
    %1107 = vmatmul.mubr.bf16.gmra.mxu0 %v214
    %v1108 = vpop.f32.mrf.mxu0
    %v1109 = vadd.f32 %v407, %v1108
    %v1110 = vpop.f32.mrf.mxu0
    %v1111 = vadd.f32 %v411, %v1110
    %v1112 = vpop.f32.mrf.mxu0
    %v1113 = vadd.f32 %v407, %v1112
    %v1114 = vpop.f32.mrf.mxu0
    %v1115 = vadd.f32 %v411, %v1114
    %1116 = vmatprep.mubr.bf16.mxu0 %v219
    %1117 = vmatmul.mubr.bf16.gmra.mxu0 %v218
    %v1118 = vpop.f32.mrf.mxu0
    %v1119 = vadd.f32 %v407, %v1118
    %v1120 = vpop.f32.mrf.mxu0
    %v1121 = vadd.f32 %v411, %v1120
    %v1122 = vpop.f32.mrf.mxu0
    %v1123 = vadd.f32 %v407, %v1122
    %v1124 = vpop.f32.mrf.mxu0
    %v1125 = vadd.f32 %v411, %v1124
    %1126 = vmatprep.mubr.bf16.mxu0 %v223
    %1127 = vmatmul.mubr.bf16.gmra.mxu0 %v222
    %v1128 = vpop.f32.mrf.mxu0
    %v1129 = vadd.f32 %v407, %v1128
    %v1130 = vpop.f32.mrf.mxu0
    %v1131 = vadd.f32 %v411, %v1130
    %v1132 = vpop.f32.mrf.mxu0
    %v1133 = vadd.f32 %v407, %v1132
    %v1134 = vpop.f32.mrf.mxu0
    %v1135 = vadd.f32 %v411, %v1134
    %1136 = vmatprep.mubr.bf16.mxu0 %v227
    %1137 = vmatmul.mubr.bf16.gmra.mxu0 %v226
    %v1138 = vpop.f32.mrf.mxu0
    %v1139 = vadd.f32 %v407, %v1138
    %v1140 = vpop.f32.mrf.mxu0
    %v1141 = vadd.f32 %v411, %v1140
    %v1142 = vpop.f32.mrf.mxu0
    %v1143 = vadd.f32 %v407, %v1142
    %v1144 = vpop.f32.mrf.mxu0
    %v1145 = vadd.f32 %v411, %v1144
    %1146 = vmatprep.mubr.bf16.mxu0 %v231
    %1147 = vmatmul.mubr.bf16.gmra.mxu0 %v230
    %v1148 = vpop.f32.mrf.mxu0
    %v1149 = vadd.f32 %v407, %v1148
    %v1150 = vpop.f32.mrf.mxu0
    %v1151 = vadd.f32 %v411, %v1150
    %v1152 = vpop.f32.mrf.mxu0
    %v1153 = vadd.f32 %v407, %v1152
    %v1154 = vpop.f32.mrf.mxu0
    %v1155 = vadd.f32 %v411, %v1154
    %1156 = vmatprep.mubr.bf16.mxu0 %v235
    %1157 = vmatmul.mubr.bf16.gmra.mxu0 %v234
    %v1158 = vpop.f32.mrf.mxu0
    %v1159 = vadd.f32 %v407, %v1158
    %v1160 = vpop.f32.mrf.mxu0
    %v1161 = vadd.f32 %v411, %v1160
    %v1162 = vpop.f32.mrf.mxu0
    %v1163 = vadd.f32 %v407, %v1162
    %v1164 = vpop.f32.mrf.mxu0
    %v1165 = vadd.f32 %v411, %v1164
    %1166 = vmatprep.mubr.bf16.mxu0 %v239
    %1167 = vmatmul.mubr.bf16.gmra.mxu0 %v238
    %v1168 = vpop.f32.mrf.mxu0
    %v1169 = vadd.f32 %v407, %v1168
    %v1170 = vpop.f32.mrf.mxu0
    %v1171 = vadd.f32 %v411, %v1170
    %v1172 = vpop.f32.mrf.mxu0
    %v1173 = vadd.f32 %v407, %v1172
    %v1174 = vpop.f32.mrf.mxu0
    %v1175 = vadd.f32 %v411, %v1174
    %1176 = vmatprep.mubr.bf16.mxu0 %v243
    %1177 = vmatmul.mubr.bf16.gmra.mxu0 %v242
    %v1178 = vpop.f32.mrf.mxu0
    %v1179 = vadd.f32 %v407, %v1178
    %v1180 = vpop.f32.mrf.mxu0
    %v1181 = vadd.f32 %v411, %v1180
    %v1182 = vpop.f32.mrf.mxu0
    %v1183 = vadd.f32 %v407, %v1182
    %v1184 = vpop.f32.mrf.mxu0
    %v1185 = vadd.f32 %v411, %v1184
    %1186 = vmatprep.mubr.bf16.mxu0 %v247
    %1187 = vmatmul.mubr.bf16.gmra.mxu0 %v246
    %v1188 = vpop.f32.mrf.mxu0
    %v1189 = vadd.f32 %v407, %v1188
    %v1190 = vpop.f32.mrf.mxu0
    %v1191 = vadd.f32 %v411, %v1190
    %v1192 = vpop.f32.mrf.mxu0
    %v1193 = vadd.f32 %v407, %v1192
    %v1194 = vpop.f32.mrf.mxu0
    %v1195 = vadd.f32 %v411, %v1194
    %1196 = vmatprep.mubr.bf16.mxu0 %v251
    %1197 = vmatmul.mubr.bf16.gmra.mxu0 %v250
    %v1198 = vpop.f32.mrf.mxu0
    %v1199 = vadd.f32 %v407, %v1198
    %v1200 = vpop.f32.mrf.mxu0
    %v1201 = vadd.f32 %v411, %v1200
    %v1202 = vpop.f32.mrf.mxu0
    %v1203 = vadd.f32 %v407, %v1202
    %v1204 = vpop.f32.mrf.mxu0
    %v1205 = vadd.f32 %v411, %v1204
    %1206 = vmatprep.mubr.bf16.mxu0 %v255
    %1207 = vmatmul.mubr.bf16.gmra.mxu0 %v254
    %v1208 = vpop.f32.mrf.mxu0
    %v1209 = vadd.f32 %v407, %v1208
    %v1210 = vpop.f32.mrf.mxu0
    %v1211 = vadd.f32 %v411, %v1210
    %v1212 = vpop.f32.mrf.mxu0
    %v1213 = vadd.f32 %v407, %v1212
    %v1214 = vpop.f32.mrf.mxu0
    %v1215 = vadd.f32 %v411, %v1214
    %1216 = vmatprep.mubr.bf16.mxu0 %v259
    %1217 = vmatmul.mubr.bf16.gmra.mxu0 %v258
    %v1218 = vpop.f32.mrf.mxu0
    %v1219 = vadd.f32 %v407, %v1218
    %v1220 = vpop.f32.mrf.mxu0
    %v1221 = vadd.f32 %v411, %v1220
    %v1222 = vpop.f32.mrf.mxu0
    %v1223 = vadd.f32 %v407, %v1222
    %v1224 = vpop.f32.mrf.mxu0
    %v1225 = vadd.f32 %v411, %v1224
    %1226 = vmatprep.mubr.bf16.mxu0 %v263
    %1227 = vmatmul.mubr.bf16.gmra.mxu0 %v262
    %v1228 = vpop.f32.mrf.mxu0
    %v1229 = vadd.f32 %v407, %v1228
    %v1230 = vpop.f32.mrf.mxu0
    %v1231 = vadd.f32 %v411, %v1230
    %v1232 = vpop.f32.mrf.mxu0
    %v1233 = vadd.f32 %v407, %v1232
    %v1234 = vpop.f32.mrf.mxu0
    %v1235 = vadd.f32 %v411, %v1234
    %1236 = vmatprep.mubr.bf16.mxu0 %v267
    %1237 = vmatmul.mubr.bf16.gmra.mxu0 %v266
    %v1238 = vpop.f32.mrf.mxu0
    %v1239 = vadd.f32 %v407, %v1238
    %v1240 = vpop.f32.mrf.mxu0
    %v1241 = vadd.f32 %v411, %v1240
    %v1242 = vpop.f32.mrf.mxu0
    %v1243 = vadd.f32 %v407, %v1242
    %v1244 = vpop.f32.mrf.mxu0
    %v1245 = vadd.f32 %v411, %v1244
    %1246 = vmatprep.mubr.bf16.mxu0 %v271
    %1247 = vmatmul.mubr.bf16.gmra.mxu0 %v270
    %v1248 = vpop.f32.mrf.mxu0
    %v1249 = vadd.f32 %v407, %v1248
    %v1250 = vpop.f32.mrf.mxu0
    %v1251 = vadd.f32 %v411, %v1250
    %v1252 = vpop.f32.mrf.mxu0
    %v1253 = vadd.f32 %v407, %v1252
    %v1254 = vpop.f32.mrf.mxu0
    %v1255 = vadd.f32 %v411, %v1254
    %1256 = vdwg.mxu0
    %1257 = vmatprep.subr.bf16.mxu0 %v901
    %1258 = vmatpush1.bf16.msra.mxu0 %v900
    %1259 = vmatprep.subr.bf16.mxu0 %v897
    %1260 = vmatpush1.bf16.msra.mxu0 %v896
    %1261 = vmatprep.subr.bf16.mxu0 %v893
    %1262 = vmatpush1.bf16.msra.mxu0 %v892
    %1263 = vmatprep.subr.bf16.mxu0 %v889
    %1264 = vmatpush1.bf16.msra.mxu0 %v888
    %1265 = vmatprep.subr.bf16.mxu0 %v885
    %1266 = vmatpush1.bf16.msra.mxu0 %v884
    %1267 = vmatprep.subr.bf16.mxu0 %v881
    %1268 = vmatpush1.bf16.msra.mxu0 %v880
    %1269 = vmatprep.subr.bf16.mxu0 %v877
    %1270 = vmatpush1.bf16.msra.mxu0 %v876
    %1271 = vmatprep.subr.bf16.mxu0 %v873
    %1272 = vmatpush1.bf16.msra.mxu0 %v872
    %1273 = vmatprep.subr.bf16.mxu0 %v933
    %1274 = vmatpush2.bf16.msra.mxu0 %v932
    %1275 = vmatprep.subr.bf16.mxu0 %v929
    %1276 = vmatpush2.bf16.msra.mxu0 %v928
    %1277 = vmatprep.subr.bf16.mxu0 %v925
    %1278 = vmatpush2.bf16.msra.mxu0 %v924
    %1279 = vmatprep.subr.bf16.mxu0 %v921
    %1280 = vmatpush2.bf16.msra.mxu0 %v920
    %1281 = vmatprep.subr.bf16.mxu0 %v917
    %1282 = vmatpush2.bf16.msra.mxu0 %v916
    %1283 = vmatprep.subr.bf16.mxu0 %v913
    %1284 = vmatpush2.bf16.msra.mxu0 %v912
    %1285 = vmatprep.subr.bf16.mxu0 %v909
    %1286 = vmatpush2.bf16.msra.mxu0 %v908
    %1287 = vmatprep.subr.bf16.mxu0 %v905
    %1288 = vmatpush2.bf16.msra.mxu0 %v904
    %1289 = vmatprep.mubr.bf16.mxu0 %v213
    %1290 = vmatmul.mubr.bf16.gmra.mxu0 %v212
    %v1291 = vpop.f32.mrf.mxu0
    %v1292 = vadd.f32 %v1099, %v1291
    %v1293 = vpop.f32.mrf.mxu0
    %v1294 = vadd.f32 %v1101, %v1293
    %v1295 = vpop.f32.mrf.mxu0
    %v1296 = vadd.f32 %v1103, %v1295
    %v1297 = vpop.f32.mrf.mxu0
    %v1298 = vadd.f32 %v1105, %v1297
    %1299 = vmatprep.mubr.bf16.mxu0 %v217
    %1300 = vmatmul.mubr.bf16.gmra.mxu0 %v216
    %v1301 = vpop.f32.mrf.mxu0
    %v1302 = vadd.f32 %v1109, %v1301
    %v1303 = vpop.f32.mrf.mxu0
    %v1304 = vadd.f32 %v1111, %v1303
    %v1305 = vpop.f32.mrf.mxu0
    %v1306 = vadd.f32 %v1113, %v1305
    %v1307 = vpop.f32.mrf.mxu0
    %v1308 = vadd.f32 %v1115, %v1307
    %1309 = vmatprep.mubr.bf16.mxu0 %v221
    %1310 = vmatmul.mubr.bf16.gmra.mxu0 %v220
    %v1311 = vpop.f32.mrf.mxu0
    %v1312 = vadd.f32 %v1119, %v1311
    %v1313 = vpop.f32.mrf.mxu0
    %v1314 = vadd.f32 %v1121, %v1313
    %v1315 = vpop.f32.mrf.mxu0
    %v1316 = vadd.f32 %v1123, %v1315
    %v1317 = vpop.f32.mrf.mxu0
    %v1318 = vadd.f32 %v1125, %v1317
    %1319 = vmatprep.mubr.bf16.mxu0 %v225
    %1320 = vmatmul.mubr.bf16.gmra.mxu0 %v224
    %v1321 = vpop.f32.mrf.mxu0
    %v1322 = vadd.f32 %v1129, %v1321
    %v1323 = vpop.f32.mrf.mxu0
    %v1324 = vadd.f32 %v1131, %v1323
    %v1325 = vpop.f32.mrf.mxu0
    %v1326 = vadd.f32 %v1133, %v1325
    %v1327 = vpop.f32.mrf.mxu0
    %v1328 = vadd.f32 %v1135, %v1327
    %1329 = vmatprep.mubr.bf16.mxu0 %v229
    %1330 = vmatmul.mubr.bf16.gmra.mxu0 %v228
    %v1331 = vpop.f32.mrf.mxu0
    %v1332 = vadd.f32 %v1139, %v1331
    %v1333 = vpop.f32.mrf.mxu0
    %v1334 = vadd.f32 %v1141, %v1333
    %v1335 = vpop.f32.mrf.mxu0
    %v1336 = vadd.f32 %v1143, %v1335
    %v1337 = vpop.f32.mrf.mxu0
    %v1338 = vadd.f32 %v1145, %v1337
    %1339 = vmatprep.mubr.bf16.mxu0 %v233
    %1340 = vmatmul.mubr.bf16.gmra.mxu0 %v232
    %v1341 = vpop.f32.mrf.mxu0
    %v1342 = vadd.f32 %v1149, %v1341
    %v1343 = vpop.f32.mrf.mxu0
    %v1344 = vadd.f32 %v1151, %v1343
    %v1345 = vpop.f32.mrf.mxu0
    %v1346 = vadd.f32 %v1153, %v1345
    %v1347 = vpop.f32.mrf.mxu0
    %v1348 = vadd.f32 %v1155, %v1347
    %1349 = vmatprep.mubr.bf16.mxu0 %v237
    %1350 = vmatmul.mubr.bf16.gmra.mxu0 %v236
    %v1351 = vpop.f32.mrf.mxu0
    %v1352 = vadd.f32 %v1159, %v1351
    %v1353 = vpop.f32.mrf.mxu0
    %v1354 = vadd.f32 %v1161, %v1353
    %v1355 = vpop.f32.mrf.mxu0
    %v1356 = vadd.f32 %v1163, %v1355
    %v1357 = vpop.f32.mrf.mxu0
    %v1358 = vadd.f32 %v1165, %v1357
    %1359 = vmatprep.mubr.bf16.mxu0 %v241
    %1360 = vmatmul.mubr.bf16.gmra.mxu0 %v240
    %v1361 = vpop.f32.mrf.mxu0
    %v1362 = vadd.f32 %v1169, %v1361
    %v1363 = vpop.f32.mrf.mxu0
    %v1364 = vadd.f32 %v1171, %v1363
    %v1365 = vpop.f32.mrf.mxu0
    %v1366 = vadd.f32 %v1173, %v1365
    %v1367 = vpop.f32.mrf.mxu0
    %v1368 = vadd.f32 %v1175, %v1367
    %1369 = vmatprep.mubr.bf16.mxu0 %v245
    %1370 = vmatmul.mubr.bf16.gmra.mxu0 %v244
    %v1371 = vpop.f32.mrf.mxu0
    %v1372 = vadd.f32 %v1179, %v1371
    %v1373 = vpop.f32.mrf.mxu0
    %v1374 = vadd.f32 %v1181, %v1373
    %v1375 = vpop.f32.mrf.mxu0
    %v1376 = vadd.f32 %v1183, %v1375
    %v1377 = vpop.f32.mrf.mxu0
    %v1378 = vadd.f32 %v1185, %v1377
    %1379 = vmatprep.mubr.bf16.mxu0 %v249
    %1380 = vmatmul.mubr.bf16.gmra.mxu0 %v248
    %v1381 = vpop.f32.mrf.mxu0
    %v1382 = vadd.f32 %v1189, %v1381
    %v1383 = vpop.f32.mrf.mxu0
    %v1384 = vadd.f32 %v1191, %v1383
    %v1385 = vpop.f32.mrf.mxu0
    %v1386 = vadd.f32 %v1193, %v1385
    %v1387 = vpop.f32.mrf.mxu0
    %v1388 = vadd.f32 %v1195, %v1387
    %1389 = vmatprep.mubr.bf16.mxu0 %v253
    %1390 = vmatmul.mubr.bf16.gmra.mxu0 %v252
    %v1391 = vpop.f32.mrf.mxu0
    %v1392 = vadd.f32 %v1199, %v1391
    %v1393 = vpop.f32.mrf.mxu0
    %v1394 = vadd.f32 %v1201, %v1393
    %v1395 = vpop.f32.mrf.mxu0
    %v1396 = vadd.f32 %v1203, %v1395
    %v1397 = vpop.f32.mrf.mxu0
    %v1398 = vadd.f32 %v1205, %v1397
    %1399 = vmatprep.mubr.bf16.mxu0 %v257
    %1400 = vmatmul.mubr.bf16.gmra.mxu0 %v256
    %v1401 = vpop.f32.mrf.mxu0
    %v1402 = vadd.f32 %v1209, %v1401
    %v1403 = vpop.f32.mrf.mxu0
    %v1404 = vadd.f32 %v1211, %v1403
    %v1405 = vpop.f32.mrf.mxu0
    %v1406 = vadd.f32 %v1213, %v1405
    %v1407 = vpop.f32.mrf.mxu0
    %v1408 = vadd.f32 %v1215, %v1407
    %1409 = vmatprep.mubr.bf16.mxu0 %v261
    %1410 = vmatmul.mubr.bf16.gmra.mxu0 %v260
    %v1411 = vpop.f32.mrf.mxu0
    %v1412 = vadd.f32 %v1219, %v1411
    %v1413 = vpop.f32.mrf.mxu0
    %v1414 = vadd.f32 %v1221, %v1413
    %v1415 = vpop.f32.mrf.mxu0
    %v1416 = vadd.f32 %v1223, %v1415
    %v1417 = vpop.f32.mrf.mxu0
    %v1418 = vadd.f32 %v1225, %v1417
    %1419 = vmatprep.mubr.bf16.mxu0 %v265
    %1420 = vmatmul.mubr.bf16.gmra.mxu0 %v264
    %v1421 = vpop.f32.mrf.mxu0
    %v1422 = vadd.f32 %v1229, %v1421
    %v1423 = vpop.f32.mrf.mxu0
    %v1424 = vadd.f32 %v1231, %v1423
    %v1425 = vpop.f32.mrf.mxu0
    %v1426 = vadd.f32 %v1233, %v1425
    %v1427 = vpop.f32.mrf.mxu0
    %v1428 = vadd.f32 %v1235, %v1427
    %1429 = vmatprep.mubr.bf16.mxu0 %v269
    %1430 = vmatmul.mubr.bf16.gmra.mxu0 %v268
    %v1431 = vpop.f32.mrf.mxu0
    %v1432 = vadd.f32 %v1239, %v1431
    %v1433 = vpop.f32.mrf.mxu0
    %v1434 = vadd.f32 %v1241, %v1433
    %v1435 = vpop.f32.mrf.mxu0
    %v1436 = vadd.f32 %v1243, %v1435
    %v1437 = vpop.f32.mrf.mxu0
    %v1438 = vadd.f32 %v1245, %v1437
    %1439 = vmatprep.mubr.bf16.mxu0 %v273
    %1440 = vmatmul.mubr.bf16.gmra.mxu0 %v272
    %v1441 = vpop.f32.mrf.mxu0
    %v1442 = vadd.f32 %v1249, %v1441
    %v1443 = vpop.f32.mrf.mxu0
    %v1444 = vadd.f32 %v1251, %v1443
    %v1445 = vpop.f32.mrf.mxu0
    %v1446 = vadd.f32 %v1253, %v1445
    %v1447 = vpop.f32.mrf.mxu0
    %v1448 = vadd.f32 %v1255, %v1447
    %1449 = vdwg.mxu0
    %1450 = vmatprep.subr.bf16.mxu0 %v839
    %1451 = vmatpush1.bf16.msra.mxu0 %v838
    %1452 = vmatprep.subr.bf16.mxu0 %v835
    %1453 = vmatpush1.bf16.msra.mxu0 %v834
    %1454 = vmatprep.subr.bf16.mxu0 %v831
    %1455 = vmatpush1.bf16.msra.mxu0 %v830
    %1456 = vmatprep.subr.bf16.mxu0 %v827
    %1457 = vmatpush1.bf16.msra.mxu0 %v826
    %1458 = vmatprep.subr.bf16.mxu0 %v823
    %1459 = vmatpush1.bf16.msra.mxu0 %v822
    %1460 = vmatprep.subr.bf16.mxu0 %v819
    %1461 = vmatpush1.bf16.msra.mxu0 %v818
    %1462 = vmatprep.subr.bf16.mxu0 %v815
    %1463 = vmatpush1.bf16.msra.mxu0 %v814
    %1464 = vmatprep.subr.bf16.mxu0 %v811
    %1465 = vmatpush1.bf16.msra.mxu0 %v810
    %1466 = vmatprep.subr.bf16.mxu0 %v871
    %1467 = vmatpush2.bf16.msra.mxu0 %v870
    %1468 = vmatprep.subr.bf16.mxu0 %v867
    %1469 = vmatpush2.bf16.msra.mxu0 %v866
    %1470 = vmatprep.subr.bf16.mxu0 %v863
    %1471 = vmatpush2.bf16.msra.mxu0 %v862
    %1472 = vmatprep.subr.bf16.mxu0 %v859
    %1473 = vmatpush2.bf16.msra.mxu0 %v858
    %1474 = vmatprep.subr.bf16.mxu0 %v855
    %1475 = vmatpush2.bf16.msra.mxu0 %v854
    %1476 = vmatprep.subr.bf16.mxu0 %v851
    %1477 = vmatpush2.bf16.msra.mxu0 %v850
    %1478 = vmatprep.subr.bf16.mxu0 %v847
    %1479 = vmatpush2.bf16.msra.mxu0 %v846
    %1480 = vmatprep.subr.bf16.mxu0 %v843
    %1481 = vmatpush2.bf16.msra.mxu0 %v842
    %1482 = vmatprep.mubr.bf16.mxu0 %v211
    %1483 = vmatmul.mubr.bf16.gmra.mxu0 %v210
    %v1484 = vpop.f32.mrf.mxu0
    %v1485 = vadd.f32 %v415, %v1484
    %v1486 = vpop.f32.mrf.mxu0
    %v1487 = vadd.f32 %v419, %v1486
    %v1488 = vpop.f32.mrf.mxu0
    %v1489 = vadd.f32 %v415, %v1488
    %v1490 = vpop.f32.mrf.mxu0
    %v1491 = vadd.f32 %v419, %v1490
    %1492 = vmatprep.mubr.bf16.mxu0 %v215
    %1493 = vmatmul.mubr.bf16.gmra.mxu0 %v214
    %v1494 = vpop.f32.mrf.mxu0
    %v1495 = vadd.f32 %v415, %v1494
    %v1496 = vpop.f32.mrf.mxu0
    %v1497 = vadd.f32 %v419, %v1496
    %v1498 = vpop.f32.mrf.mxu0
    %v1499 = vadd.f32 %v415, %v1498
    %v1500 = vpop.f32.mrf.mxu0
    %v1501 = vadd.f32 %v419, %v1500
    %1502 = vmatprep.mubr.bf16.mxu0 %v219
    %1503 = vmatmul.mubr.bf16.gmra.mxu0 %v218
    %v1504 = vpop.f32.mrf.mxu0
    %v1505 = vadd.f32 %v415, %v1504
    %v1506 = vpop.f32.mrf.mxu0
    %v1507 = vadd.f32 %v419, %v1506
    %v1508 = vpop.f32.mrf.mxu0
    %v1509 = vadd.f32 %v415, %v1508
    %v1510 = vpop.f32.mrf.mxu0
    %v1511 = vadd.f32 %v419, %v1510
    %1512 = vmatprep.mubr.bf16.mxu0 %v223
    %1513 = vmatmul.mubr.bf16.gmra.mxu0 %v222
    %v1514 = vpop.f32.mrf.mxu0
    %v1515 = vadd.f32 %v415, %v1514
    %v1516 = vpop.f32.mrf.mxu0
    %v1517 = vadd.f32 %v419, %v1516
    %v1518 = vpop.f32.mrf.mxu0
    %v1519 = vadd.f32 %v415, %v1518
    %v1520 = vpop.f32.mrf.mxu0
    %v1521 = vadd.f32 %v419, %v1520
    %1522 = vmatprep.mubr.bf16.mxu0 %v227
    %1523 = vmatmul.mubr.bf16.gmra.mxu0 %v226
    %v1524 = vpop.f32.mrf.mxu0
    %v1525 = vadd.f32 %v415, %v1524
    %v1526 = vpop.f32.mrf.mxu0
    %v1527 = vadd.f32 %v419, %v1526
    %v1528 = vpop.f32.mrf.mxu0
    %v1529 = vadd.f32 %v415, %v1528
    %v1530 = vpop.f32.mrf.mxu0
    %v1531 = vadd.f32 %v419, %v1530
    %1532 = vmatprep.mubr.bf16.mxu0 %v231
    %1533 = vmatmul.mubr.bf16.gmra.mxu0 %v230
    %v1534 = vpop.f32.mrf.mxu0
    %v1535 = vadd.f32 %v415, %v1534
    %v1536 = vpop.f32.mrf.mxu0
    %v1537 = vadd.f32 %v419, %v1536
    %v1538 = vpop.f32.mrf.mxu0
    %v1539 = vadd.f32 %v415, %v1538
    %v1540 = vpop.f32.mrf.mxu0
    %v1541 = vadd.f32 %v419, %v1540
    %1542 = vmatprep.mubr.bf16.mxu0 %v235
    %1543 = vmatmul.mubr.bf16.gmra.mxu0 %v234
    %v1544 = vpop.f32.mrf.mxu0
    %v1545 = vadd.f32 %v415, %v1544
    %v1546 = vpop.f32.mrf.mxu0
    %v1547 = vadd.f32 %v419, %v1546
    %v1548 = vpop.f32.mrf.mxu0
    %v1549 = vadd.f32 %v415, %v1548
    %v1550 = vpop.f32.mrf.mxu0
    %v1551 = vadd.f32 %v419, %v1550
    %1552 = vmatprep.mubr.bf16.mxu0 %v239
    %1553 = vmatmul.mubr.bf16.gmra.mxu0 %v238
    %v1554 = vpop.f32.mrf.mxu0
    %v1555 = vadd.f32 %v415, %v1554
    %v1556 = vpop.f32.mrf.mxu0
    %v1557 = vadd.f32 %v419, %v1556
    %v1558 = vpop.f32.mrf.mxu0
    %v1559 = vadd.f32 %v415, %v1558
    %v1560 = vpop.f32.mrf.mxu0
    %v1561 = vadd.f32 %v419, %v1560
    %1562 = vmatprep.mubr.bf16.mxu0 %v243
    %1563 = vmatmul.mubr.bf16.gmra.mxu0 %v242
    %v1564 = vpop.f32.mrf.mxu0
    %v1565 = vadd.f32 %v415, %v1564
    %v1566 = vpop.f32.mrf.mxu0
    %v1567 = vadd.f32 %v419, %v1566
    %v1568 = vpop.f32.mrf.mxu0
    %v1569 = vadd.f32 %v415, %v1568
    %v1570 = vpop.f32.mrf.mxu0
    %v1571 = vadd.f32 %v419, %v1570
    %1572 = vmatprep.mubr.bf16.mxu0 %v247
    %1573 = vmatmul.mubr.bf16.gmra.mxu0 %v246
    %v1574 = vpop.f32.mrf.mxu0
    %v1575 = vadd.f32 %v415, %v1574
    %v1576 = vpop.f32.mrf.mxu0
    %v1577 = vadd.f32 %v419, %v1576
    %v1578 = vpop.f32.mrf.mxu0
    %v1579 = vadd.f32 %v415, %v1578
    %v1580 = vpop.f32.mrf.mxu0
    %v1581 = vadd.f32 %v419, %v1580
    %1582 = vmatprep.mubr.bf16.mxu0 %v251
    %1583 = vmatmul.mubr.bf16.gmra.mxu0 %v250
    %v1584 = vpop.f32.mrf.mxu0
    %v1585 = vadd.f32 %v415, %v1584
    %v1586 = vpop.f32.mrf.mxu0
    %v1587 = vadd.f32 %v419, %v1586
    %v1588 = vpop.f32.mrf.mxu0
    %v1589 = vadd.f32 %v415, %v1588
    %v1590 = vpop.f32.mrf.mxu0
    %v1591 = vadd.f32 %v419, %v1590
    %1592 = vmatprep.mubr.bf16.mxu0 %v255
    %1593 = vmatmul.mubr.bf16.gmra.mxu0 %v254
    %v1594 = vpop.f32.mrf.mxu0
    %v1595 = vadd.f32 %v415, %v1594
    %v1596 = vpop.f32.mrf.mxu0
    %v1597 = vadd.f32 %v419, %v1596
    %v1598 = vpop.f32.mrf.mxu0
    %v1599 = vadd.f32 %v415, %v1598
    %v1600 = vpop.f32.mrf.mxu0
    %v1601 = vadd.f32 %v419, %v1600
    %1602 = vmatprep.mubr.bf16.mxu0 %v259
    %1603 = vmatmul.mubr.bf16.gmra.mxu0 %v258
    %v1604 = vpop.f32.mrf.mxu0
    %v1605 = vadd.f32 %v415, %v1604
    %v1606 = vpop.f32.mrf.mxu0
    %v1607 = vadd.f32 %v419, %v1606
    %v1608 = vpop.f32.mrf.mxu0
    %v1609 = vadd.f32 %v415, %v1608
    %v1610 = vpop.f32.mrf.mxu0
    %v1611 = vadd.f32 %v419, %v1610
    %1612 = vmatprep.mubr.bf16.mxu0 %v263
    %1613 = vmatmul.mubr.bf16.gmra.mxu0 %v262
    %v1614 = vpop.f32.mrf.mxu0
    %v1615 = vadd.f32 %v415, %v1614
    %v1616 = vpop.f32.mrf.mxu0
    %v1617 = vadd.f32 %v419, %v1616
    %v1618 = vpop.f32.mrf.mxu0
    %v1619 = vadd.f32 %v415, %v1618
    %v1620 = vpop.f32.mrf.mxu0
    %v1621 = vadd.f32 %v419, %v1620
    %1622 = vmatprep.mubr.bf16.mxu0 %v267
    %1623 = vmatmul.mubr.bf16.gmra.mxu0 %v266
    %v1624 = vpop.f32.mrf.mxu0
    %v1625 = vadd.f32 %v415, %v1624
    %v1626 = vpop.f32.mrf.mxu0
    %v1627 = vadd.f32 %v419, %v1626
    %v1628 = vpop.f32.mrf.mxu0
    %v1629 = vadd.f32 %v415, %v1628
    %v1630 = vpop.f32.mrf.mxu0
    %v1631 = vadd.f32 %v419, %v1630
    %1632 = vmatprep.mubr.bf16.mxu0 %v271
    %1633 = vmatmul.mubr.bf16.gmra.mxu0 %v270
    %v1634 = vpop.f32.mrf.mxu0
    %v1635 = vadd.f32 %v415, %v1634
    %v1636 = vpop.f32.mrf.mxu0
    %v1637 = vadd.f32 %v419, %v1636
    %v1638 = vpop.f32.mrf.mxu0
    %v1639 = vadd.f32 %v415, %v1638
    %v1640 = vpop.f32.mrf.mxu0
    %v1641 = vadd.f32 %v419, %v1640
    %1642 = vdwg.mxu0
    %1643 = vmatprep.subr.bf16.mxu0 %v903
    %1644 = vmatpush1.bf16.msra.mxu0 %v902
    %1645 = vmatprep.subr.bf16.mxu0 %v899
    %1646 = vmatpush1.bf16.msra.mxu0 %v898
    %1647 = vmatprep.subr.bf16.mxu0 %v895
    %1648 = vmatpush1.bf16.msra.mxu0 %v894
    %1649 = vmatprep.subr.bf16.mxu0 %v891
    %1650 = vmatpush1.bf16.msra.mxu0 %v890
    %1651 = vmatprep.subr.bf16.mxu0 %v887
    %1652 = vmatpush1.bf16.msra.mxu0 %v886
    %1653 = vmatprep.subr.bf16.mxu0 %v883
    %1654 = vmatpush1.bf16.msra.mxu0 %v882
    %1655 = vmatprep.subr.bf16.mxu0 %v879
    %1656 = vmatpush1.bf16.msra.mxu0 %v878
    %1657 = vmatprep.subr.bf16.mxu0 %v875
    %1658 = vmatpush1.bf16.msra.mxu0 %v874
    %1659 = vmatprep.subr.bf16.mxu0 %v935
    %1660 = vmatpush2.bf16.msra.mxu0 %v934
    %1661 = vmatprep.subr.bf16.mxu0 %v931
    %1662 = vmatpush2.bf16.msra.mxu0 %v930
    %1663 = vmatprep.subr.bf16.mxu0 %v927
    %1664 = vmatpush2.bf16.msra.mxu0 %v926
    %1665 = vmatprep.subr.bf16.mxu0 %v923
    %1666 = vmatpush2.bf16.msra.mxu0 %v922
    %1667 = vmatprep.subr.bf16.mxu0 %v919
    %1668 = vmatpush2.bf16.msra.mxu0 %v918
    %1669 = vmatprep.subr.bf16.mxu0 %v915
    %1670 = vmatpush2.bf16.msra.mxu0 %v914
    %1671 = vmatprep.subr.bf16.mxu0 %v911
    %1672 = vmatpush2.bf16.msra.mxu0 %v910
    %1673 = vmatprep.subr.bf16.mxu0 %v907
    %1674 = vmatpush2.bf16.msra.mxu0 %v906
    %1675 = vmatprep.mubr.bf16.mxu0 %v213
    %1676 = vmatmul.mubr.bf16.gmra.mxu0 %v212
    %v1677 = vpop.f32.mrf.mxu0
    %v1678 = vadd.f32 %v1485, %v1677
    %v1679 = vpop.f32.mrf.mxu0
    %v1680 = vadd.f32 %v1487, %v1679
    %v1681 = vpop.f32.mrf.mxu0
    %v1682 = vadd.f32 %v1489, %v1681
    %v1683 = vpop.f32.mrf.mxu0
    %v1684 = vadd.f32 %v1491, %v1683
    %1685 = vmatprep.mubr.bf16.mxu0 %v217
    %1686 = vmatmul.mubr.bf16.gmra.mxu0 %v216
    %v1687 = vpop.f32.mrf.mxu0
    %v1688 = vadd.f32 %v1495, %v1687
    %v1689 = vpop.f32.mrf.mxu0
    %v1690 = vadd.f32 %v1497, %v1689
    %v1691 = vpop.f32.mrf.mxu0
    %v1692 = vadd.f32 %v1499, %v1691
    %v1693 = vpop.f32.mrf.mxu0
    %v1694 = vadd.f32 %v1501, %v1693
    %1695 = vmatprep.mubr.bf16.mxu0 %v221
    %1696 = vmatmul.mubr.bf16.gmra.mxu0 %v220
    %v1697 = vpop.f32.mrf.mxu0
    %v1698 = vadd.f32 %v1505, %v1697
    %v1699 = vpop.f32.mrf.mxu0
    %v1700 = vadd.f32 %v1507, %v1699
    %v1701 = vpop.f32.mrf.mxu0
    %v1702 = vadd.f32 %v1509, %v1701
    %v1703 = vpop.f32.mrf.mxu0
    %v1704 = vadd.f32 %v1511, %v1703
    %1705 = vmatprep.mubr.bf16.mxu0 %v225
    %1706 = vmatmul.mubr.bf16.gmra.mxu0 %v224
    %v1707 = vpop.f32.mrf.mxu0
    %v1708 = vadd.f32 %v1515, %v1707
    %v1709 = vpop.f32.mrf.mxu0
    %v1710 = vadd.f32 %v1517, %v1709
    %v1711 = vpop.f32.mrf.mxu0
    %v1712 = vadd.f32 %v1519, %v1711
    %v1713 = vpop.f32.mrf.mxu0
    %v1714 = vadd.f32 %v1521, %v1713
    %1715 = vmatprep.mubr.bf16.mxu0 %v229
    %1716 = vmatmul.mubr.bf16.gmra.mxu0 %v228
    %v1717 = vpop.f32.mrf.mxu0
    %v1718 = vadd.f32 %v1525, %v1717
    %v1719 = vpop.f32.mrf.mxu0
    %v1720 = vadd.f32 %v1527, %v1719
    %v1721 = vpop.f32.mrf.mxu0
    %v1722 = vadd.f32 %v1529, %v1721
    %v1723 = vpop.f32.mrf.mxu0
    %v1724 = vadd.f32 %v1531, %v1723
    %1725 = vmatprep.mubr.bf16.mxu0 %v233
    %1726 = vmatmul.mubr.bf16.gmra.mxu0 %v232
    %v1727 = vpop.f32.mrf.mxu0
    %v1728 = vadd.f32 %v1535, %v1727
    %v1729 = vpop.f32.mrf.mxu0
    %v1730 = vadd.f32 %v1537, %v1729
    %v1731 = vpop.f32.mrf.mxu0
    %v1732 = vadd.f32 %v1539, %v1731
    %v1733 = vpop.f32.mrf.mxu0
    %v1734 = vadd.f32 %v1541, %v1733
    %1735 = vmatprep.mubr.bf16.mxu0 %v237
    %1736 = vmatmul.mubr.bf16.gmra.mxu0 %v236
    %v1737 = vpop.f32.mrf.mxu0
    %v1738 = vadd.f32 %v1545, %v1737
    %v1739 = vpop.f32.mrf.mxu0
    %v1740 = vadd.f32 %v1547, %v1739
    %v1741 = vpop.f32.mrf.mxu0
    %v1742 = vadd.f32 %v1549, %v1741
    %v1743 = vpop.f32.mrf.mxu0
    %v1744 = vadd.f32 %v1551, %v1743
    %1745 = vmatprep.mubr.bf16.mxu0 %v241
    %1746 = vmatmul.mubr.bf16.gmra.mxu0 %v240
    %v1747 = vpop.f32.mrf.mxu0
    %v1748 = vadd.f32 %v1555, %v1747
    %v1749 = vpop.f32.mrf.mxu0
    %v1750 = vadd.f32 %v1557, %v1749
    %v1751 = vpop.f32.mrf.mxu0
    %v1752 = vadd.f32 %v1559, %v1751
    %v1753 = vpop.f32.mrf.mxu0
    %v1754 = vadd.f32 %v1561, %v1753
    %1755 = vmatprep.mubr.bf16.mxu0 %v245
    %1756 = vmatmul.mubr.bf16.gmra.mxu0 %v244
    %v1757 = vpop.f32.mrf.mxu0
    %v1758 = vadd.f32 %v1565, %v1757
    %v1759 = vpop.f32.mrf.mxu0
    %v1760 = vadd.f32 %v1567, %v1759
    %v1761 = vpop.f32.mrf.mxu0
    %v1762 = vadd.f32 %v1569, %v1761
    %v1763 = vpop.f32.mrf.mxu0
    %v1764 = vadd.f32 %v1571, %v1763
    %1765 = vmatprep.mubr.bf16.mxu0 %v249
    %1766 = vmatmul.mubr.bf16.gmra.mxu0 %v248
    %v1767 = vpop.f32.mrf.mxu0
    %v1768 = vadd.f32 %v1575, %v1767
    %v1769 = vpop.f32.mrf.mxu0
    %v1770 = vadd.f32 %v1577, %v1769
    %v1771 = vpop.f32.mrf.mxu0
    %v1772 = vadd.f32 %v1579, %v1771
    %v1773 = vpop.f32.mrf.mxu0
    %v1774 = vadd.f32 %v1581, %v1773
    %1775 = vmatprep.mubr.bf16.mxu0 %v253
    %1776 = vmatmul.mubr.bf16.gmra.mxu0 %v252
    %v1777 = vpop.f32.mrf.mxu0
    %v1778 = vadd.f32 %v1585, %v1777
    %v1779 = vpop.f32.mrf.mxu0
    %v1780 = vadd.f32 %v1587, %v1779
    %v1781 = vpop.f32.mrf.mxu0
    %v1782 = vadd.f32 %v1589, %v1781
    %v1783 = vpop.f32.mrf.mxu0
    %v1784 = vadd.f32 %v1591, %v1783
    %1785 = vmatprep.mubr.bf16.mxu0 %v257
    %1786 = vmatmul.mubr.bf16.gmra.mxu0 %v256
    %v1787 = vpop.f32.mrf.mxu0
    %v1788 = vadd.f32 %v1595, %v1787
    %v1789 = vpop.f32.mrf.mxu0
    %v1790 = vadd.f32 %v1597, %v1789
    %v1791 = vpop.f32.mrf.mxu0
    %v1792 = vadd.f32 %v1599, %v1791
    %v1793 = vpop.f32.mrf.mxu0
    %v1794 = vadd.f32 %v1601, %v1793
    %1795 = vmatprep.mubr.bf16.mxu0 %v261
    %1796 = vmatmul.mubr.bf16.gmra.mxu0 %v260
    %v1797 = vpop.f32.mrf.mxu0
    %v1798 = vadd.f32 %v1605, %v1797
    %v1799 = vpop.f32.mrf.mxu0
    %v1800 = vadd.f32 %v1607, %v1799
    %v1801 = vpop.f32.mrf.mxu0
    %v1802 = vadd.f32 %v1609, %v1801
    %v1803 = vpop.f32.mrf.mxu0
    %v1804 = vadd.f32 %v1611, %v1803
    %1805 = vmatprep.mubr.bf16.mxu0 %v265
    %1806 = vmatmul.mubr.bf16.gmra.mxu0 %v264
    %v1807 = vpop.f32.mrf.mxu0
    %v1808 = vadd.f32 %v1615, %v1807
    %v1809 = vpop.f32.mrf.mxu0
    %v1810 = vadd.f32 %v1617, %v1809
    %v1811 = vpop.f32.mrf.mxu0
    %v1812 = vadd.f32 %v1619, %v1811
    %v1813 = vpop.f32.mrf.mxu0
    %v1814 = vadd.f32 %v1621, %v1813
    %1815 = vmatprep.mubr.bf16.mxu0 %v269
    %1816 = vmatmul.mubr.bf16.gmra.mxu0 %v268
    %v1817 = vpop.f32.mrf.mxu0
    %v1818 = vadd.f32 %v1625, %v1817
    %v1819 = vpop.f32.mrf.mxu0
    %v1820 = vadd.f32 %v1627, %v1819
    %v1821 = vpop.f32.mrf.mxu0
    %v1822 = vadd.f32 %v1629, %v1821
    %v1823 = vpop.f32.mrf.mxu0
    %v1824 = vadd.f32 %v1631, %v1823
    %1825 = vmatprep.mubr.bf16.mxu0 %v273
    %1826 = vmatmul.mubr.bf16.gmra.mxu0 %v272
    %v1827 = vpop.f32.mrf.mxu0
    %v1828 = vadd.f32 %v1635, %v1827
    %v1829 = vpop.f32.mrf.mxu0
    %v1830 = vadd.f32 %v1637, %v1829
    %v1831 = vpop.f32.mrf.mxu0
    %v1832 = vadd.f32 %v1639, %v1831
    %v1833 = vpop.f32.mrf.mxu0
    %v1834 = vadd.f32 %v1641, %v1833
    %1835 = vdwg.mxu0
    %v1836 = vmax.f32 %v1292, 0.0
    %v1837 = vmax.f32 %v1294, 0.0
    %v1838 = vmax.f32 %v1678, 0.0
    %v1839 = vmax.f32 %v1680, 0.0
    %v1840 = vmax.f32 %v1296, 0.0
    %v1841 = vmax.f32 %v1298, 0.0
    %v1842 = vmax.f32 %v1682, 0.0
    %v1843 = vmax.f32 %v1684, 0.0
    %v1844 = vmax.f32 %v1302, 0.0
    %v1845 = vmax.f32 %v1304, 0.0
    %v1846 = vmax.f32 %v1688, 0.0
    %v1847 = vmax.f32 %v1690, 0.0
    %v1848 = vmax.f32 %v1306, 0.0
    %v1849 = vmax.f32 %v1308, 0.0
    %v1850 = vmax.f32 %v1692, 0.0
    %v1851 = vmax.f32 %v1694, 0.0
    %v1852 = vmax.f32 %v1312, 0.0
    %v1853 = vmax.f32 %v1314, 0.0
    %v1854 = vmax.f32 %v1698, 0.0
    %v1855 = vmax.f32 %v1700, 0.0
    %v1856 = vmax.f32 %v1316, 0.0
    %v1857 = vmax.f32 %v1318, 0.0
    %v1858 = vmax.f32 %v1702, 0.0
    %v1859 = vmax.f32 %v1704, 0.0
    %v1860 = vmax.f32 %v1322, 0.0
    %v1861 = vmax.f32 %v1324, 0.0
    %v1862 = vmax.f32 %v1708, 0.0
    %v1863 = vmax.f32 %v1710, 0.0
    %v1864 = vmax.f32 %v1326, 0.0
    %v1865 = vmax.f32 %v1328, 0.0
    %v1866 = vmax.f32 %v1712, 0.0
    %v1867 = vmax.f32 %v1714, 0.0
    %v1868 = vmax.f32 %v1332, 0.0
    %v1869 = vmax.f32 %v1334, 0.0
    %v1870 = vmax.f32 %v1718, 0.0
    %v1871 = vmax.f32 %v1720, 0.0
    %v1872 = vmax.f32 %v1336, 0.0
    %v1873 = vmax.f32 %v1338, 0.0
    %v1874 = vmax.f32 %v1722, 0.0
    %v1875 = vmax.f32 %v1724, 0.0
    %v1876 = vmax.f32 %v1342, 0.0
    %v1877 = vmax.f32 %v1344, 0.0
    %v1878 = vmax.f32 %v1728, 0.0
    %v1879 = vmax.f32 %v1730, 0.0
    %v1880 = vmax.f32 %v1346, 0.0
    %v1881 = vmax.f32 %v1348, 0.0
    %v1882 = vmax.f32 %v1732, 0.0
    %v1883 = vmax.f32 %v1734, 0.0
    %v1884 = vmax.f32 %v1352, 0.0
    %v1885 = vmax.f32 %v1354, 0.0
    %v1886 = vmax.f32 %v1738, 0.0
    %v1887 = vmax.f32 %v1740, 0.0
    %v1888 = vmax.f32 %v1356, 0.0
    %v1889 = vmax.f32 %v1358, 0.0
    %v1890 = vmax.f32 %v1742, 0.0
    %v1891 = vmax.f32 %v1744, 0.0
    %v1892 = vmax.f32 %v1362, 0.0
    %v1893 = vmax.f32 %v1364, 0.0
    %v1894 = vmax.f32 %v1748, 0.0
    %v1895 = vmax.f32 %v1750, 0.0
    %v1896 = vmax.f32 %v1366, 0.0
    %v1897 = vmax.f32 %v1368, 0.0
    %v1898 = vmax.f32 %v1752, 0.0
    %v1899 = vmax.f32 %v1754, 0.0
    %v1900 = vmax.f32 %v1372, 0.0
    %v1901 = vmax.f32 %v1374, 0.0
    %v1902 = vmax.f32 %v1758, 0.0
    %v1903 = vmax.f32 %v1760, 0.0
    %v1904 = vmax.f32 %v1376, 0.0
    %v1905 = vmax.f32 %v1378, 0.0
    %v1906 = vmax.f32 %v1762, 0.0
    %v1907 = vmax.f32 %v1764, 0.0
    %v1908 = vmax.f32 %v1382, 0.0
    %v1909 = vmax.f32 %v1384, 0.0
    %v1910 = vmax.f32 %v1768, 0.0
    %v1911 = vmax.f32 %v1770, 0.0
    %v1912 = vmax.f32 %v1386, 0.0
    %v1913 = vmax.f32 %v1388, 0.0
    %v1914 = vmax.f32 %v1772, 0.0
    %v1915 = vmax.f32 %v1774, 0.0
    %v1916 = vmax.f32 %v1392, 0.0
    %v1917 = vmax.f32 %v1394, 0.0
    %v1918 = vmax.f32 %v1778, 0.0
    %v1919 = vmax.f32 %v1780, 0.0
    %v1920 = vmax.f32 %v1396, 0.0
    %v1921 = vmax.f32 %v1398, 0.0
    %v1922 = vmax.f32 %v1782, 0.0
    %v1923 = vmax.f32 %v1784, 0.0
    %v1924 = vmax.f32 %v1402, 0.0
    %v1925 = vmax.f32 %v1404, 0.0
    %v1926 = vmax.f32 %v1788, 0.0
    %v1927 = vmax.f32 %v1790, 0.0
    %v1928 = vmax.f32 %v1406, 0.0
    %v1929 = vmax.f32 %v1408, 0.0
    %v1930 = vmax.f32 %v1792, 0.0
    %v1931 = vmax.f32 %v1794, 0.0
    %v1932 = vmax.f32 %v1412, 0.0
    %v1933 = vmax.f32 %v1414, 0.0
    %v1934 = vmax.f32 %v1798, 0.0
    %v1935 = vmax.f32 %v1800, 0.0
    %v1936 = vmax.f32 %v1416, 0.0
    %v1937 = vmax.f32 %v1418, 0.0
    %v1938 = vmax.f32 %v1802, 0.0
    %v1939 = vmax.f32 %v1804, 0.0
    %v1940 = vmax.f32 %v1422, 0.0
    %v1941 = vmax.f32 %v1424, 0.0
    %v1942 = vmax.f32 %v1808, 0.0
    %v1943 = vmax.f32 %v1810, 0.0
    %v1944 = vmax.f32 %v1426, 0.0
    %v1945 = vmax.f32 %v1428, 0.0
    %v1946 = vmax.f32 %v1812, 0.0
    %v1947 = vmax.f32 %v1814, 0.0
    %v1948 = vmax.f32 %v1432, 0.0
    %v1949 = vmax.f32 %v1434, 0.0
    %v1950 = vmax.f32 %v1818, 0.0
    %v1951 = vmax.f32 %v1820, 0.0
    %v1952 = vmax.f32 %v1436, 0.0
    %v1953 = vmax.f32 %v1438, 0.0
    %v1954 = vmax.f32 %v1822, 0.0
    %v1955 = vmax.f32 %v1824, 0.0
    %v1956 = vmax.f32 %v1442, 0.0
    %v1957 = vmax.f32 %v1444, 0.0
    %v1958 = vmax.f32 %v1828, 0.0
    %v1959 = vmax.f32 %v1830, 0.0
    %v1960 = vmax.f32 %v1446, 0.0
    %v1961 = vmax.f32 %v1448, 0.0
    %v1962 = vmax.f32 %v1832, 0.0
    %v1963 = vmax.f32 %v1834, 0.0
    %v1964 = vld [vmem:[#allocation2] sm:$0xf]
    %v1965 = vadd.f32 %v1836, %v1840
    %v1966 = vadd.f32 %v1965, %v1844
    %v1967 = vadd.f32 %v1966, %v1848
    %v1968 = vadd.f32 %v1967, %v1852
    %v1969 = vadd.f32 %v1968, %v1856
    %v1970 = vadd.f32 %v1969, %v1860
    %v1971 = vadd.f32 %v1970, %v1864
    %v1972 = vadd.f32 %v1971, %v1868
    %v1973 = vadd.f32 %v1972, %v1872
    %v1974 = vadd.f32 %v1973, %v1876
    %v1975 = vadd.f32 %v1974, %v1880
    %v1976 = vadd.f32 %v1975, %v1884
    %v1977 = vadd.f32 %v1976, %v1888
    %v1978 = vadd.f32 %v1977, %v1892
    %v1979 = vadd.f32 %v1978, %v1896
    %v1980 = vadd.f32 %v1979, %v1900
    %v1981 = vadd.f32 %v1980, %v1904
    %v1982 = vadd.f32 %v1981, %v1908
    %v1983 = vadd.f32 %v1982, %v1912
    %v1984 = vadd.f32 %v1983, %v1916
    %v1985 = vadd.f32 %v1984, %v1920
    %v1986 = vadd.f32 %v1985, %v1924
    %v1987 = vadd.f32 %v1986, %v1928
    %v1988 = vadd.f32 %v1987, %v1932
    %v1989 = vadd.f32 %v1988, %v1936
    %v1990 = vadd.f32 %v1989, %v1940
    %v1991 = vadd.f32 %v1990, %v1944
    %v1992 = vadd.f32 %v1991, %v1948
    %v1993 = vadd.f32 %v1992, %v1952
    %v1994 = vadd.f32 %v1993, %v1956
    %v1995 = vadd.f32 %v1994, %v1960
    %v1996 = vrot.slane %v1995, 4
    %v1997 = vadd.f32 %v1995, %v1996
    %v1998 = vrot.slane %v1997, 2
    %v1999 = vadd.f32 %v1997, %v1998
    %v2000 = vrot.slane %v1999, 1
    %v2001 = vadd.f32 %v1999, %v2000
    %v2002 = vadd.f32 %v1837, %v1841
    %v2003 = vadd.f32 %v2002, %v1845
    %v2004 = vadd.f32 %v2003, %v1849
    %v2005 = vadd.f32 %v2004, %v1853
    %v2006 = vadd.f32 %v2005, %v1857
    %v2007 = vadd.f32 %v2006, %v1861
    %v2008 = vadd.f32 %v2007, %v1865
    %v2009 = vadd.f32 %v2008, %v1869
    %v2010 = vadd.f32 %v2009, %v1873
    %v2011 = vadd.f32 %v2010, %v1877
    %v2012 = vadd.f32 %v2011, %v1881
    %v2013 = vadd.f32 %v2012, %v1885
    %v2014 = vadd.f32 %v2013, %v1889
    %v2015 = vadd.f32 %v2014, %v1893
    %v2016 = vadd.f32 %v2015, %v1897
    %v2017 = vadd.f32 %v2016, %v1901
    %v2018 = vadd.f32 %v2017, %v1905
    %v2019 = vadd.f32 %v2018, %v1909
    %v2020 = vadd.f32 %v2019, %v1913
    %v2021 = vadd.f32 %v2020, %v1917
    %v2022 = vadd.f32 %v2021, %v1921
    %v2023 = vadd.f32 %v2022, %v1925
    %v2024 = vadd.f32 %v2023, %v1929
    %v2025 = vadd.f32 %v2024, %v1933
    %v2026 = vadd.f32 %v2025, %v1937
    %v2027 = vadd.f32 %v2026, %v1941
    %v2028 = vadd.f32 %v2027, %v1945
    %v2029 = vadd.f32 %v2028, %v1949
    %v2030 = vadd.f32 %v2029, %v1953
    %v2031 = vadd.f32 %v2030, %v1957
    %v2032 = vadd.f32 %v2031, %v1961
    %v2033 = vrot.slane %v2032, 4
    %v2034 = vadd.f32 %v2032, %v2033
    %v2035 = vrot.slane %v2034, 2
    %v2036 = vadd.f32 %v2034, %v2035
    %v2037 = vrot.slane %v2036, 1
    %v2038 = vadd.f32 %v2036, %v2037
    %v2039 = vadd.f32 %v1838, %v1842
    %v2040 = vadd.f32 %v2039, %v1846
    %v2041 = vadd.f32 %v2040, %v1850
    %v2042 = vadd.f32 %v2041, %v1854
    %v2043 = vadd.f32 %v2042, %v1858
    %v2044 = vadd.f32 %v2043, %v1862
    %v2045 = vadd.f32 %v2044, %v1866
    %v2046 = vadd.f32 %v2045, %v1870
    %v2047 = vadd.f32 %v2046, %v1874
    %v2048 = vadd.f32 %v2047, %v1878
    %v2049 = vadd.f32 %v2048, %v1882
    %v2050 = vadd.f32 %v2049, %v1886
    %v2051 = vadd.f32 %v2050, %v1890
    %v2052 = vadd.f32 %v2051, %v1894
    %v2053 = vadd.f32 %v2052, %v1898
    %v2054 = vadd.f32 %v2053, %v1902
    %v2055 = vadd.f32 %v2054, %v1906
    %v2056 = vadd.f32 %v2055, %v1910
    %v2057 = vadd.f32 %v2056, %v1914
    %v2058 = vadd.f32 %v2057, %v1918
    %v2059 = vadd.f32 %v2058, %v1922
    %v2060 = vadd.f32 %v2059, %v1926
    %v2061 = vadd.f32 %v2060, %v1930
    %v2062 = vadd.f32 %v2061, %v1934
    %v2063 = vadd.f32 %v2062, %v1938
    %v2064 = vadd.f32 %v2063, %v1942
    %v2065 = vadd.f32 %v2064, %v1946
    %v2066 = vadd.f32 %v2065, %v1950
    %v2067 = vadd.f32 %v2066, %v1954
    %v2068 = vadd.f32 %v2067, %v1958
    %v2069 = vadd.f32 %v2068, %v1962
    %v2070 = vrot.slane %v2069, 4
    %v2071 = vadd.f32 %v2069, %v2070
    %v2072 = vrot.slane %v2071, 2
    %v2073 = vadd.f32 %v2071, %v2072
    %v2074 = vrot.slane %v2073, 1
    %v2075 = vadd.f32 %v2073, %v2074
    %v2076 = vadd.f32 %v1839, %v1843
    %v2077 = vadd.f32 %v2076, %v1847
    %v2078 = vadd.f32 %v2077, %v1851
    %v2079 = vadd.f32 %v2078, %v1855
    %v2080 = vadd.f32 %v2079, %v1859
    %v2081 = vadd.f32 %v2080, %v1863
    %v2082 = vadd.f32 %v2081, %v1867
    %v2083 = vadd.f32 %v2082, %v1871
    %v2084 = vadd.f32 %v2083, %v1875
    %v2085 = vadd.f32 %v2084, %v1879
    %v2086 = vadd.f32 %v2085, %v1883
    %v2087 = vadd.f32 %v2086, %v1887
    %v2088 = vadd.f32 %v2087, %v1891
    %v2089 = vadd.f32 %v2088, %v1895
    %v2090 = vadd.f32 %v2089, %v1899
    %v2091 = vadd.f32 %v2090, %v1903
    %v2092 = vadd.f32 %v2091, %v1907
    %v2093 = vadd.f32 %v2092, %v1911
    %v2094 = vadd.f32 %v2093, %v1915
    %v2095 = vadd.f32 %v2094, %v1919
    %v2096 = vadd.f32 %v2095, %v1923
    %v2097 = vadd.f32 %v2096, %v1927
    %v2098 = vadd.f32 %v2097, %v1931
    %v2099 = vadd.f32 %v2098, %v1935
    %v2100 = vadd.f32 %v2099, %v1939
    %v2101 = vadd.f32 %v2100, %v1943
    %v2102 = vadd.f32 %v2101, %v1947
    %v2103 = vadd.f32 %v2102, %v1951
    %v2104 = vadd.f32 %v2103, %v1955
    %v2105 = vadd.f32 %v2104, %v1959
    %v2106 = vadd.f32 %v2105, %v1963
    %v2107 = vrot.slane %v2106, 4
    %v2108 = vadd.f32 %v2106, %v2107
    %v2109 = vrot.slane %v2108, 2
    %v2110 = vadd.f32 %v2108, %v2109
    %v2111 = vrot.slane %v2110, 1
    %v2112 = vadd.f32 %v2110, %v2111
    %v2117 = vcombine.low %v2001, %v2038
    %v2118 = vcombine.low %v2075, %v2112
    %v2120 = vunpack.c.l.s4 1966171168
    %v2121 = vunpack.c.0.s8 %v2120
    %v2122 = vlaneseq
    %v2123 = vshrl.u32 %v2122, 7
    %v2124 = vsub.s32 %v2121, %v2123
    %v2125 = vrot.slane %v2117, %v2124
    %v2127 = vunpack.c.l.s4 1966171168
    %v2128 = vunpack.c.0.s8 %v2127
    %v2129 = vlaneseq
    %v2130 = vshrl.u32 %v2129, 7
    %v2131 = vsub.s32 %v2128, %v2130
    %v2132 = vrot.slane %v2118, %v2131
    %v2133 = vcombine.low %v2125, %v2132
    %v2135 = vunpack.c.l.s4 1966171168
    %v2136 = vunpack.c.0.s8 %v2135
    %v2137 = vlaneseq
    %v2138 = vshrl.u32 %v2137, 7
    %v2139 = vsub.s32 %v2136, %v2138
    %v2140 = vrot.slane %v2133, %v2139
    %v2142 = vadd.f32 %v1964, %v2140
    %v2143 = vlaneseq
    %vm2144 = vcmp.ge.s32.totalorder %v2143, 0
    %vm2145 = vcmp.lt.s32.totalorder %v2143, 512
    %vm2146 = vmand %vm2144, %vm2145
    %2147 = vst.msk [vmem:[#allocation2] sm:$0xf] %vm2146, %v2142
    %v2148 = vld [vmem:[#allocation3] sm:$0xf]
    %v2149 = vmul.f32 %v1836, %v1836
    %v2150 = vmul.f32 %v1837, %v1837
    %v2151 = vmul.f32 %v1838, %v1838
    %v2152 = vmul.f32 %v1839, %v1839
    %v2153 = vmul.f32 %v1840, %v1840
    %v2154 = vmul.f32 %v1841, %v1841
    %v2155 = vmul.f32 %v1842, %v1842
    %v2156 = vmul.f32 %v1843, %v1843
    %v2157 = vmul.f32 %v1844, %v1844
    %v2158 = vmul.f32 %v1845, %v1845
    %v2159 = vmul.f32 %v1846, %v1846
    %v2160 = vmul.f32 %v1847, %v1847
    %v2161 = vmul.f32 %v1848, %v1848
    %v2162 = vmul.f32 %v1849, %v1849
    %v2163 = vmul.f32 %v1850, %v1850
    %v2164 = vmul.f32 %v1851, %v1851
    %v2165 = vmul.f32 %v1852, %v1852
    %v2166 = vmul.f32 %v1853, %v1853
    %v2167 = vmul.f32 %v1854, %v1854
    %v2168 = vmul.f32 %v1855, %v1855
    %v2169 = vmul.f32 %v1856, %v1856
    %v2170 = vmul.f32 %v1857, %v1857
    %v2171 = vmul.f32 %v1858, %v1858
    %v2172 = vmul.f32 %v1859, %v1859
    %v2173 = vmul.f32 %v1860, %v1860
    %v2174 = vmul.f32 %v1861, %v1861
    %v2175 = vmul.f32 %v1862, %v1862
    %v2176 = vmul.f32 %v1863, %v1863
    %v2177 = vmul.f32 %v1864, %v1864
    %v2178 = vmul.f32 %v1865, %v1865
    %v2179 = vmul.f32 %v1866, %v1866
    %v2180 = vmul.f32 %v1867, %v1867
    %v2181 = vmul.f32 %v1868, %v1868
    %v2182 = vmul.f32 %v1869, %v1869
    %v2183 = vmul.f32 %v1870, %v1870
    %v2184 = vmul.f32 %v1871, %v1871
    %v2185 = vmul.f32 %v1872, %v1872
    %v2186 = vmul.f32 %v1873, %v1873
    %v2187 = vmul.f32 %v1874, %v1874
    %v2188 = vmul.f32 %v1875, %v1875
    %v2189 = vmul.f32 %v1876, %v1876
    %v2190 = vmul.f32 %v1877, %v1877
    %v2191 = vmul.f32 %v1878, %v1878
    %v2192 = vmul.f32 %v1879, %v1879
    %v2193 = vmul.f32 %v1880, %v1880
    %v2194 = vmul.f32 %v1881, %v1881
    %v2195 = vmul.f32 %v1882, %v1882
    %v2196 = vmul.f32 %v1883, %v1883
    %v2197 = vmul.f32 %v1884, %v1884
    %v2198 = vmul.f32 %v1885, %v1885
    %v2199 = vmul.f32 %v1886, %v1886
    %v2200 = vmul.f32 %v1887, %v1887
    %v2201 = vmul.f32 %v1888, %v1888
    %v2202 = vmul.f32 %v1889, %v1889
    %v2203 = vmul.f32 %v1890, %v1890
    %v2204 = vmul.f32 %v1891, %v1891
    %v2205 = vmul.f32 %v1892, %v1892
    %v2206 = vmul.f32 %v1893, %v1893
    %v2207 = vmul.f32 %v1894, %v1894
    %v2208 = vmul.f32 %v1895, %v1895
    %v2209 = vmul.f32 %v1896, %v1896
    %v2210 = vmul.f32 %v1897, %v1897
    %v2211 = vmul.f32 %v1898, %v1898
    %v2212 = vmul.f32 %v1899, %v1899
    %v2213 = vmul.f32 %v1900, %v1900
    %v2214 = vmul.f32 %v1901, %v1901
    %v2215 = vmul.f32 %v1902, %v1902
    %v2216 = vmul.f32 %v1903, %v1903
    %v2217 = vmul.f32 %v1904, %v1904
    %v2218 = vmul.f32 %v1905, %v1905
    %v2219 = vmul.f32 %v1906, %v1906
    %v2220 = vmul.f32 %v1907, %v1907
    %v2221 = vmul.f32 %v1908, %v1908
    %v2222 = vmul.f32 %v1909, %v1909
    %v2223 = vmul.f32 %v1910, %v1910
    %v2224 = vmul.f32 %v1911, %v1911
    %v2225 = vmul.f32 %v1912, %v1912
    %v2226 = vmul.f32 %v1913, %v1913
    %v2227 = vmul.f32 %v1914, %v1914
    %v2228 = vmul.f32 %v1915, %v1915
    %v2229 = vmul.f32 %v1916, %v1916
    %v2230 = vmul.f32 %v1917, %v1917
    %v2231 = vmul.f32 %v1918, %v1918
    %v2232 = vmul.f32 %v1919, %v1919
    %v2233 = vmul.f32 %v1920, %v1920
    %v2234 = vmul.f32 %v1921, %v1921
    %v2235 = vmul.f32 %v1922, %v1922
    %v2236 = vmul.f32 %v1923, %v1923
    %v2237 = vmul.f32 %v1924, %v1924
    %v2238 = vmul.f32 %v1925, %v1925
    %v2239 = vmul.f32 %v1926, %v1926
    %v2240 = vmul.f32 %v1927, %v1927
    %v2241 = vmul.f32 %v1928, %v1928
    %v2242 = vmul.f32 %v1929, %v1929
    %v2243 = vmul.f32 %v1930, %v1930
    %v2244 = vmul.f32 %v1931, %v1931
    %v2245 = vmul.f32 %v1932, %v1932
    %v2246 = vmul.f32 %v1933, %v1933
    %v2247 = vmul.f32 %v1934, %v1934
    %v2248 = vmul.f32 %v1935, %v1935
    %v2249 = vmul.f32 %v1936, %v1936
    %v2250 = vmul.f32 %v1937, %v1937
    %v2251 = vmul.f32 %v1938, %v1938
    %v2252 = vmul.f32 %v1939, %v1939
    %v2253 = vmul.f32 %v1940, %v1940
    %v2254 = vmul.f32 %v1941, %v1941
    %v2255 = vmul.f32 %v1942, %v1942
    %v2256 = vmul.f32 %v1943, %v1943
    %v2257 = vmul.f32 %v1944, %v1944
    %v2258 = vmul.f32 %v1945, %v1945
    %v2259 = vmul.f32 %v1946, %v1946
    %v2260 = vmul.f32 %v1947, %v1947
    %v2261 = vmul.f32 %v1948, %v1948
    %v2262 = vmul.f32 %v1949, %v1949
    %v2263 = vmul.f32 %v1950, %v1950
    %v2264 = vmul.f32 %v1951, %v1951
    %v2265 = vmul.f32 %v1952, %v1952
    %v2266 = vmul.f32 %v1953, %v1953
    %v2267 = vmul.f32 %v1954, %v1954
    %v2268 = vmul.f32 %v1955, %v1955
    %v2269 = vmul.f32 %v1956, %v1956
    %v2270 = vmul.f32 %v1957, %v1957
    %v2271 = vmul.f32 %v1958, %v1958
    %v2272 = vmul.f32 %v1959, %v1959
    %v2273 = vmul.f32 %v1960, %v1960
    %v2274 = vmul.f32 %v1961, %v1961
    %v2275 = vmul.f32 %v1962, %v1962
    %v2276 = vmul.f32 %v1963, %v1963
    %v2277 = vadd.f32 %v2149, %v2153
    %v2278 = vadd.f32 %v2277, %v2157
    %v2279 = vadd.f32 %v2278, %v2161
    %v2280 = vadd.f32 %v2279, %v2165
    %v2281 = vadd.f32 %v2280, %v2169
    %v2282 = vadd.f32 %v2281, %v2173
    %v2283 = vadd.f32 %v2282, %v2177
    %v2284 = vadd.f32 %v2283, %v2181
    %v2285 = vadd.f32 %v2284, %v2185
    %v2286 = vadd.f32 %v2285, %v2189
    %v2287 = vadd.f32 %v2286, %v2193
    %v2288 = vadd.f32 %v2287, %v2197
    %v2289 = vadd.f32 %v2288, %v2201
    %v2290 = vadd.f32 %v2289, %v2205
    %v2291 = vadd.f32 %v2290, %v2209
    %v2292 = vadd.f32 %v2291, %v2213
    %v2293 = vadd.f32 %v2292, %v2217
    %v2294 = vadd.f32 %v2293, %v2221
    %v2295 = vadd.f32 %v2294, %v2225
    %v2296 = vadd.f32 %v2295, %v2229
    %v2297 = vadd.f32 %v2296, %v2233
    %v2298 = vadd.f32 %v2297, %v2237
    %v2299 = vadd.f32 %v2298, %v2241
    %v2300 = vadd.f32 %v2299, %v2245
    %v2301 = vadd.f32 %v2300, %v2249
    %v2302 = vadd.f32 %v2301, %v2253
    %v2303 = vadd.f32 %v2302, %v2257
    %v2304 = vadd.f32 %v2303, %v2261
    %v2305 = vadd.f32 %v2304, %v2265
    %v2306 = vadd.f32 %v2305, %v2269
    %v2307 = vadd.f32 %v2306, %v2273
    %v2308 = vrot.slane %v2307, 4
    %v2309 = vadd.f32 %v2307, %v2308
    %v2310 = vrot.slane %v2309, 2
    %v2311 = vadd.f32 %v2309, %v2310
    %v2312 = vrot.slane %v2311, 1
    %v2313 = vadd.f32 %v2311, %v2312
    %v2314 = vadd.f32 %v2150, %v2154
    %v2315 = vadd.f32 %v2314, %v2158
    %v2316 = vadd.f32 %v2315, %v2162
    %v2317 = vadd.f32 %v2316, %v2166
    %v2318 = vadd.f32 %v2317, %v2170
    %v2319 = vadd.f32 %v2318, %v2174
    %v2320 = vadd.f32 %v2319, %v2178
    %v2321 = vadd.f32 %v2320, %v2182
    %v2322 = vadd.f32 %v2321, %v2186
    %v2323 = vadd.f32 %v2322, %v2190
    %v2324 = vadd.f32 %v2323, %v2194
    %v2325 = vadd.f32 %v2324, %v2198
    %v2326 = vadd.f32 %v2325, %v2202
    %v2327 = vadd.f32 %v2326, %v2206
    %v2328 = vadd.f32 %v2327, %v2210
    %v2329 = vadd.f32 %v2328, %v2214
    %v2330 = vadd.f32 %v2329, %v2218
    %v2331 = vadd.f32 %v2330, %v2222
    %v2332 = vadd.f32 %v2331, %v2226
    %v2333 = vadd.f32 %v2332, %v2230
    %v2334 = vadd.f32 %v2333, %v2234
    %v2335 = vadd.f32 %v2334, %v2238
    %v2336 = vadd.f32 %v2335, %v2242
    %v2337 = vadd.f32 %v2336, %v2246
    %v2338 = vadd.f32 %v2337, %v2250
    %v2339 = vadd.f32 %v2338, %v2254
    %v2340 = vadd.f32 %v2339, %v2258
    %v2341 = vadd.f32 %v2340, %v2262
    %v2342 = vadd.f32 %v2341, %v2266
    %v2343 = vadd.f32 %v2342, %v2270
    %v2344 = vadd.f32 %v2343, %v2274
    %v2345 = vrot.slane %v2344, 4
    %v2346 = vadd.f32 %v2344, %v2345
    %v2347 = vrot.slane %v2346, 2
    %v2348 = vadd.f32 %v2346, %v2347
    %v2349 = vrot.slane %v2348, 1
    %v2350 = vadd.f32 %v2348, %v2349
    %v2351 = vadd.f32 %v2151, %v2155
    %v2352 = vadd.f32 %v2351, %v2159
    %v2353 = vadd.f32 %v2352, %v2163
    %v2354 = vadd.f32 %v2353, %v2167
    %v2355 = vadd.f32 %v2354, %v2171
    %v2356 = vadd.f32 %v2355, %v2175
    %v2357 = vadd.f32 %v2356, %v2179
    %v2358 = vadd.f32 %v2357, %v2183
    %v2359 = vadd.f32 %v2358, %v2187
    %v2360 = vadd.f32 %v2359, %v2191
    %v2361 = vadd.f32 %v2360, %v2195
    %v2362 = vadd.f32 %v2361, %v2199
    %v2363 = vadd.f32 %v2362, %v2203
    %v2364 = vadd.f32 %v2363, %v2207
    %v2365 = vadd.f32 %v2364, %v2211
    %v2366 = vadd.f32 %v2365, %v2215
    %v2367 = vadd.f32 %v2366, %v2219
    %v2368 = vadd.f32 %v2367, %v2223
    %v2369 = vadd.f32 %v2368, %v2227
    %v2370 = vadd.f32 %v2369, %v2231
    %v2371 = vadd.f32 %v2370, %v2235
    %v2372 = vadd.f32 %v2371, %v2239
    %v2373 = vadd.f32 %v2372, %v2243
    %v2374 = vadd.f32 %v2373, %v2247
    %v2375 = vadd.f32 %v2374, %v2251
    %v2376 = vadd.f32 %v2375, %v2255
    %v2377 = vadd.f32 %v2376, %v2259
    %v2378 = vadd.f32 %v2377, %v2263
    %v2379 = vadd.f32 %v2378, %v2267
    %v2380 = vadd.f32 %v2379, %v2271
    %v2381 = vadd.f32 %v2380, %v2275
    %v2382 = vrot.slane %v2381, 4
    %v2383 = vadd.f32 %v2381, %v2382
    %v2384 = vrot.slane %v2383, 2
    %v2385 = vadd.f32 %v2383, %v2384
    %v2386 = vrot.slane %v2385, 1
    %v2387 = vadd.f32 %v2385, %v2386
    %v2388 = vadd.f32 %v2152, %v2156
    %v2389 = vadd.f32 %v2388, %v2160
    %v2390 = vadd.f32 %v2389, %v2164
    %v2391 = vadd.f32 %v2390, %v2168
    %v2392 = vadd.f32 %v2391, %v2172
    %v2393 = vadd.f32 %v2392, %v2176
    %v2394 = vadd.f32 %v2393, %v2180
    %v2395 = vadd.f32 %v2394, %v2184
    %v2396 = vadd.f32 %v2395, %v2188
    %v2397 = vadd.f32 %v2396, %v2192
    %v2398 = vadd.f32 %v2397, %v2196
    %v2399 = vadd.f32 %v2398, %v2200
    %v2400 = vadd.f32 %v2399, %v2204
    %v2401 = vadd.f32 %v2400, %v2208
    %v2402 = vadd.f32 %v2401, %v2212
    %v2403 = vadd.f32 %v2402, %v2216
    %v2404 = vadd.f32 %v2403, %v2220
    %v2405 = vadd.f32 %v2404, %v2224
    %v2406 = vadd.f32 %v2405, %v2228
    %v2407 = vadd.f32 %v2406, %v2232
    %v2408 = vadd.f32 %v2407, %v2236
    %v2409 = vadd.f32 %v2408, %v2240
    %v2410 = vadd.f32 %v2409, %v2244
    %v2411 = vadd.f32 %v2410, %v2248
    %v2412 = vadd.f32 %v2411, %v2252
    %v2413 = vadd.f32 %v2412, %v2256
    %v2414 = vadd.f32 %v2413, %v2260
    %v2415 = vadd.f32 %v2414, %v2264
    %v2416 = vadd.f32 %v2415, %v2268
    %v2417 = vadd.f32 %v2416, %v2272
    %v2418 = vadd.f32 %v2417, %v2276
    %v2419 = vrot.slane %v2418, 4
    %v2420 = vadd.f32 %v2418, %v2419
    %v2421 = vrot.slane %v2420, 2
    %v2422 = vadd.f32 %v2420, %v2421
    %v2423 = vrot.slane %v2422, 1
    %v2424 = vadd.f32 %v2422, %v2423
    %v2429 = vcombine.low %v2313, %v2350
    %v2430 = vcombine.low %v2387, %v2424
    %v2432 = vunpack.c.l.s4 1966171168
    %v2433 = vunpack.c.0.s8 %v2432
    %v2434 = vlaneseq
    %v2435 = vshrl.u32 %v2434, 7
    %v2436 = vsub.s32 %v2433, %v2435
    %v2437 = vrot.slane %v2429, %v2436
    %v2439 = vunpack.c.l.s4 1966171168
    %v2440 = vunpack.c.0.s8 %v2439
    %v2441 = vlaneseq
    %v2442 = vshrl.u32 %v2441, 7
    %v2443 = vsub.s32 %v2440, %v2442
    %v2444 = vrot.slane %v2430, %v2443
    %v2445 = vcombine.low %v2437, %v2444
    %v2447 = vunpack.c.l.s4 1966171168
    %v2448 = vunpack.c.0.s8 %v2447
    %v2449 = vlaneseq
    %v2450 = vshrl.u32 %v2449, 7
    %v2451 = vsub.s32 %v2448, %v2450
    %v2452 = vrot.slane %v2445, %v2451
    %v2454 = vadd.f32 %v2148, %v2452
    %2455 = vst.msk [vmem:[#allocation3] sm:$0xf] %vm2146, %v2454
    // Predicated region
    $region42: #{xvector_trainer_forward.1} parent=1 // pred_check
      %p2456 = pneg %p72
    $region43: #{xvector_trainer_forward.1} parent=1 // pred_check_branch
      %2458 = sbr.rel (%p2456) target = $region45
    $region44: #{xvector_trainer_forward.1} parent=1 // pred_region
      %v2459 = vld [vmem:[#allocation2] sm:$0xf]
      %v2460 = vld [vmem:[#allocation3] sm:$0xf]
      %v2461 = vld [vmem:[%s3] sm:$0xf]
      %v2462 = vld [vmem:[#allocation10] sm:$0xf]
      %v2463 = vmul.f32 %v2459, 0.00390625
      %v2464 = vmul.f32 %v2460, 0.00390625
      %v2465 = vmul.f32 %v2463, %v2463
      %v2466 = vsub.f32 %v2464, %v2465
      %v2467 = vmax.f32 %v2466, 0.0
      %v2468 = vadd.f32 %v2467, 1e-05
      %v2469 = vrsqrt.pop %v2468
      %v2470 = vmul.f32 %v2461, %v2469
      %v2471 = vmul.f32 %v2463, %v2470
      %v2472 = vsub.f32 %v2462, %v2471
      %v2474 = vlaneseq
      %v2475 = vshrl.u32 %v2474, 7
      %v2476 = vsub.s32 0, %v2475
      %v2477 = vrot.slane %v2470, %v2476
      %v2478 = vlaneseq
      %v2479 = vshrl.u32 %v2478, 7
      %v2480 = vsub.s32 1, %v2479
      %v2481 = vrot.slane %v2470, %v2480
      %v2482 = vlaneseq
      %v2483 = vshrl.u32 %v2482, 7
      %v2484 = vsub.s32 2, %v2483
      %v2485 = vrot.slane %v2470, %v2484
      %v2486 = vlaneseq
      %v2487 = vshrl.u32 %v2486, 7
      %v2488 = vsub.s32 3, %v2487
      %v2489 = vrot.slane %v2470, %v2488
      %v2494 = vmul.f32 %v1836, %v2477
      %v2495 = vmul.f32 %v1837, %v2481
      %v2496 = vmul.f32 %v1838, %v2485
      %v2497 = vmul.f32 %v1839, %v2489
      %v2498 = vmul.f32 %v1840, %v2477
      %v2499 = vmul.f32 %v1841, %v2481
      %v2500 = vmul.f32 %v1842, %v2485
      %v2501 = vmul.f32 %v1843, %v2489
      %v2502 = vmul.f32 %v1844, %v2477
      %v2503 = vmul.f32 %v1845, %v2481
      %v2504 = vmul.f32 %v1846, %v2485
      %v2505 = vmul.f32 %v1847, %v2489
      %v2506 = vmul.f32 %v1848, %v2477
      %v2507 = vmul.f32 %v1849, %v2481
      %v2508 = vmul.f32 %v1850, %v2485
      %v2509 = vmul.f32 %v1851, %v2489
      %v2510 = vmul.f32 %v1852, %v2477
      %v2511 = vmul.f32 %v1853, %v2481
      %v2512 = vmul.f32 %v1854, %v2485
      %v2513 = vmul.f32 %v1855, %v2489
      %v2514 = vmul.f32 %v1856, %v2477
      %v2515 = vmul.f32 %v1857, %v2481
      %v2516 = vmul.f32 %v1858, %v2485
      %v2517 = vmul.f32 %v1859, %v2489
      %v2518 = vmul.f32 %v1860, %v2477
      %v2519 = vmul.f32 %v1861, %v2481
      %v2520 = vmul.f32 %v1862, %v2485
      %v2521 = vmul.f32 %v1863, %v2489
      %v2522 = vmul.f32 %v1864, %v2477
      %v2523 = vmul.f32 %v1865, %v2481
      %v2524 = vmul.f32 %v1866, %v2485
      %v2525 = vmul.f32 %v1867, %v2489
      %v2526 = vmul.f32 %v1868, %v2477
      %v2527 = vmul.f32 %v1869, %v2481
      %v2528 = vmul.f32 %v1870, %v2485
      %v2529 = vmul.f32 %v1871, %v2489
      %v2530 = vmul.f32 %v1872, %v2477
      %v2531 = vmul.f32 %v1873, %v2481
      %v2532 = vmul.f32 %v1874, %v2485
      %v2533 = vmul.f32 %v1875, %v2489
      %v2534 = vmul.f32 %v1876, %v2477
      %v2535 = vmul.f32 %v1877, %v2481
      %v2536 = vmul.f32 %v1878, %v2485
      %v2537 = vmul.f32 %v1879, %v2489
      %v2538 = vmul.f32 %v1880, %v2477
      %v2539 = vmul.f32 %v1881, %v2481
      %v2540 = vmul.f32 %v1882, %v2485
      %v2541 = vmul.f32 %v1883, %v2489
      %v2542 = vmul.f32 %v1884, %v2477
      %v2543 = vmul.f32 %v1885, %v2481
      %v2544 = vmul.f32 %v1886, %v2485
      %v2545 = vmul.f32 %v1887, %v2489
      %v2546 = vmul.f32 %v1888, %v2477
      %v2547 = vmul.f32 %v1889, %v2481
      %v2548 = vmul.f32 %v1890, %v2485
      %v2549 = vmul.f32 %v1891, %v2489
      %v2550 = vmul.f32 %v1892, %v2477
      %v2551 = vmul.f32 %v1893, %v2481
      %v2552 = vmul.f32 %v1894, %v2485
      %v2553 = vmul.f32 %v1895, %v2489
      %v2554 = vmul.f32 %v1896, %v2477
      %v2555 = vmul.f32 %v1897, %v2481
      %v2556 = vmul.f32 %v1898, %v2485
      %v2557 = vmul.f32 %v1899, %v2489
      %v2558 = vmul.f32 %v1900, %v2477
      %v2559 = vmul.f32 %v1901, %v2481
      %v2560 = vmul.f32 %v1902, %v2485
      %v2561 = vmul.f32 %v1903, %v2489
      %v2562 = vmul.f32 %v1904, %v2477
      %v2563 = vmul.f32 %v1905, %v2481
      %v2564 = vmul.f32 %v1906, %v2485
      %v2565 = vmul.f32 %v1907, %v2489
      %v2566 = vmul.f32 %v1908, %v2477
      %v2567 = vmul.f32 %v1909, %v2481
      %v2568 = vmul.f32 %v1910, %v2485
      %v2569 = vmul.f32 %v1911, %v2489
      %v2570 = vmul.f32 %v1912, %v2477
      %v2571 = vmul.f32 %v1913, %v2481
      %v2572 = vmul.f32 %v1914, %v2485
      %v2573 = vmul.f32 %v1915, %v2489
      %v2574 = vmul.f32 %v1916, %v2477
      %v2575 = vmul.f32 %v1917, %v2481
      %v2576 = vmul.f32 %v1918, %v2485
      %v2577 = vmul.f32 %v1919, %v2489
      %v2578 = vmul.f32 %v1920, %v2477
      %v2579 = vmul.f32 %v1921, %v2481
      %v2580 = vmul.f32 %v1922, %v2485
      %v2581 = vmul.f32 %v1923, %v2489
      %v2582 = vmul.f32 %v1924, %v2477
      %v2583 = vmul.f32 %v1925, %v2481
      %v2584 = vmul.f32 %v1926, %v2485
      %v2585 = vmul.f32 %v1927, %v2489
      %v2586 = vmul.f32 %v1928, %v2477
      %v2587 = vmul.f32 %v1929, %v2481
      %v2588 = vmul.f32 %v1930, %v2485
      %v2589 = vmul.f32 %v1931, %v2489
      %v2590 = vmul.f32 %v1932, %v2477
      %v2591 = vmul.f32 %v1933, %v2481
      %v2592 = vmul.f32 %v1934, %v2485
      %v2593 = vmul.f32 %v1935, %v2489
      %v2594 = vmul.f32 %v1936, %v2477
      %v2595 = vmul.f32 %v1937, %v2481
      %v2596 = vmul.f32 %v1938, %v2485
      %v2597 = vmul.f32 %v1939, %v2489
      %v2598 = vmul.f32 %v1940, %v2477
      %v2599 = vmul.f32 %v1941, %v2481
      %v2600 = vmul.f32 %v1942, %v2485
      %v2601 = vmul.f32 %v1943, %v2489
      %v2602 = vmul.f32 %v1944, %v2477
      %v2603 = vmul.f32 %v1945, %v2481
      %v2604 = vmul.f32 %v1946, %v2485
      %v2605 = vmul.f32 %v1947, %v2489
      %v2606 = vmul.f32 %v1948, %v2477
      %v2607 = vmul.f32 %v1949, %v2481
      %v2608 = vmul.f32 %v1950, %v2485
      %v2609 = vmul.f32 %v1951, %v2489
      %v2610 = vmul.f32 %v1952, %v2477
      %v2611 = vmul.f32 %v1953, %v2481
      %v2612 = vmul.f32 %v1954, %v2485
      %v2613 = vmul.f32 %v1955, %v2489
      %v2614 = vmul.f32 %v1956, %v2477
      %v2615 = vmul.f32 %v1957, %v2481
      %v2616 = vmul.f32 %v1958, %v2485
      %v2617 = vmul.f32 %v1959, %v2489
      %v2618 = vmul.f32 %v1960, %v2477
      %v2619 = vmul.f32 %v1961, %v2481
      %v2620 = vmul.f32 %v1962, %v2485
      %v2621 = vmul.f32 %v1963, %v2489
      %v2623 = vlaneseq
      %v2624 = vshrl.u32 %v2623, 7
      %v2625 = vsub.s32 0, %v2624
      %v2626 = vrot.slane %v2472, %v2625
      %v2627 = vlaneseq
      %v2628 = vshrl.u32 %v2627, 7
      %v2629 = vsub.s32 1, %v2628
      %v2630 = vrot.slane %v2472, %v2629
      %v2631 = vlaneseq
      %v2632 = vshrl.u32 %v2631, 7
      %v2633 = vsub.s32 2, %v2632
      %v2634 = vrot.slane %v2472, %v2633
      %v2635 = vlaneseq
      %v2636 = vshrl.u32 %v2635, 7
      %v2637 = vsub.s32 3, %v2636
      %v2638 = vrot.slane %v2472, %v2637
      %v2643 = vadd.f32 %v2494, %v2626
      %v2644 = vadd.f32 %v2495, %v2630
      %v2645 = vadd.f32 %v2496, %v2634
      %v2646 = vadd.f32 %v2497, %v2638
      %v2647 = vadd.f32 %v2498, %v2626
      %v2648 = vadd.f32 %v2499, %v2630
      %v2649 = vadd.f32 %v2500, %v2634
      %v2650 = vadd.f32 %v2501, %v2638
      %v2651 = vadd.f32 %v2502, %v2626
      %v2652 = vadd.f32 %v2503, %v2630
      %v2653 = vadd.f32 %v2504, %v2634
      %v2654 = vadd.f32 %v2505, %v2638
      %v2655 = vadd.f32 %v2506, %v2626
      %v2656 = vadd.f32 %v2507, %v2630
      %v2657 = vadd.f32 %v2508, %v2634
      %v2658 = vadd.f32 %v2509, %v2638
      %v2659 = vadd.f32 %v2510, %v2626
      %v2660 = vadd.f32 %v2511, %v2630
      %v2661 = vadd.f32 %v2512, %v2634
      %v2662 = vadd.f32 %v2513, %v2638
      %v2663 = vadd.f32 %v2514, %v2626
      %v2664 = vadd.f32 %v2515, %v2630
      %v2665 = vadd.f32 %v2516, %v2634
      %v2666 = vadd.f32 %v2517, %v2638
      %v2667 = vadd.f32 %v2518, %v2626
      %v2668 = vadd.f32 %v2519, %v2630
      %v2669 = vadd.f32 %v2520, %v2634
      %v2670 = vadd.f32 %v2521, %v2638
      %v2671 = vadd.f32 %v2522, %v2626
      %v2672 = vadd.f32 %v2523, %v2630
      %v2673 = vadd.f32 %v2524, %v2634
      %v2674 = vadd.f32 %v2525, %v2638
      %v2675 = vadd.f32 %v2526, %v2626
      %v2676 = vadd.f32 %v2527, %v2630
      %v2677 = vadd.f32 %v2528, %v2634
      %v2678 = vadd.f32 %v2529, %v2638
      %v2679 = vadd.f32 %v2530, %v2626
      %v2680 = vadd.f32 %v2531, %v2630
      %v2681 = vadd.f32 %v2532, %v2634
      %v2682 = vadd.f32 %v2533, %v2638
      %v2683 = vadd.f32 %v2534, %v2626
      %v2684 = vadd.f32 %v2535, %v2630
      %v2685 = vadd.f32 %v2536, %v2634
      %v2686 = vadd.f32 %v2537, %v2638
      %v2687 = vadd.f32 %v2538, %v2626
      %v2688 = vadd.f32 %v2539, %v2630
      %v2689 = vadd.f32 %v2540, %v2634
      %v2690 = vadd.f32 %v2541, %v2638
      %v2691 = vadd.f32 %v2542, %v2626
      %v2692 = vadd.f32 %v2543, %v2630
      %v2693 = vadd.f32 %v2544, %v2634
      %v2694 = vadd.f32 %v2545, %v2638
      %v2695 = vadd.f32 %v2546, %v2626
      %v2696 = vadd.f32 %v2547, %v2630
      %v2697 = vadd.f32 %v2548, %v2634
      %v2698 = vadd.f32 %v2549, %v2638
      %v2699 = vadd.f32 %v2550, %v2626
      %v2700 = vadd.f32 %v2551, %v2630
      %v2701 = vadd.f32 %v2552, %v2634
      %v2702 = vadd.f32 %v2553, %v2638
      %v2703 = vadd.f32 %v2554, %v2626
      %v2704 = vadd.f32 %v2555, %v2630
      %v2705 = vadd.f32 %v2556, %v2634
      %v2706 = vadd.f32 %v2557, %v2638
      %v2707 = vadd.f32 %v2558, %v2626
      %v2708 = vadd.f32 %v2559, %v2630
      %v2709 = vadd.f32 %v2560, %v2634
      %v2710 = vadd.f32 %v2561, %v2638
      %v2711 = vadd.f32 %v2562, %v2626
      %v2712 = vadd.f32 %v2563, %v2630
      %v2713 = vadd.f32 %v2564, %v2634
      %v2714 = vadd.f32 %v2565, %v2638
      %v2715 = vadd.f32 %v2566, %v2626
      %v2716 = vadd.f32 %v2567, %v2630
      %v2717 = vadd.f32 %v2568, %v2634
      %v2718 = vadd.f32 %v2569, %v2638
      %v2719 = vadd.f32 %v2570, %v2626
      %v2720 = vadd.f32 %v2571, %v2630
      %v2721 = vadd.f32 %v2572, %v2634
      %v2722 = vadd.f32 %v2573, %v2638
      %v2723 = vadd.f32 %v2574, %v2626
      %v2724 = vadd.f32 %v2575, %v2630
      %v2725 = vadd.f32 %v2576, %v2634
      %v2726 = vadd.f32 %v2577, %v2638
      %v2727 = vadd.f32 %v2578, %v2626
      %v2728 = vadd.f32 %v2579, %v2630
      %v2729 = vadd.f32 %v2580, %v2634
      %v2730 = vadd.f32 %v2581, %v2638
      %v2731 = vadd.f32 %v2582, %v2626
      %v2732 = vadd.f32 %v2583, %v2630
      %v2733 = vadd.f32 %v2584, %v2634
      %v2734 = vadd.f32 %v2585, %v2638
      %v2735 = vadd.f32 %v2586, %v2626
      %v2736 = vadd.f32 %v2587, %v2630
      %v2737 = vadd.f32 %v2588, %v2634
      %v2738 = vadd.f32 %v2589, %v2638
      %v2739 = vadd.f32 %v2590, %v2626
      %v2740 = vadd.f32 %v2591, %v2630
      %v2741 = vadd.f32 %v2592, %v2634
      %v2742 = vadd.f32 %v2593, %v2638
      %v2743 = vadd.f32 %v2594, %v2626
      %v2744 = vadd.f32 %v2595, %v2630
      %v2745 = vadd.f32 %v2596, %v2634
      %v2746 = vadd.f32 %v2597, %v2638
      %v2747 = vadd.f32 %v2598, %v2626
      %v2748 = vadd.f32 %v2599, %v2630
      %v2749 = vadd.f32 %v2600, %v2634
      %v2750 = vadd.f32 %v2601, %v2638
      %v2751 = vadd.f32 %v2602, %v2626
      %v2752 = vadd.f32 %v2603, %v2630
      %v2753 = vadd.f32 %v2604, %v2634
      %v2754 = vadd.f32 %v2605, %v2638
      %v2755 = vadd.f32 %v2606, %v2626
      %v2756 = vadd.f32 %v2607, %v2630
      %v2757 = vadd.f32 %v2608, %v2634
      %v2758 = vadd.f32 %v2609, %v2638
      %v2759 = vadd.f32 %v2610, %v2626
      %v2760 = vadd.f32 %v2611, %v2630
      %v2761 = vadd.f32 %v2612, %v2634
      %v2762 = vadd.f32 %v2613, %v2638
      %v2763 = vadd.f32 %v2614, %v2626
      %v2764 = vadd.f32 %v2615, %v2630
      %v2765 = vadd.f32 %v2616, %v2634
      %v2766 = vadd.f32 %v2617, %v2638
      %v2767 = vadd.f32 %v2618, %v2626
      %v2768 = vadd.f32 %v2619, %v2630
      %v2769 = vadd.f32 %v2620, %v2634
      %v2770 = vadd.f32 %v2621, %v2638
      %2771 = vst [vmem:[#allocation12] sm:$0xff] %v2643
      %2772 = vst [vmem:[#allocation12 + $0x8] sm:$0xff] %v2644
      %2773 = vst [vmem:[#allocation12 + $0x10] sm:$0xff] %v2645
      %2774 = vst [vmem:[#allocation12 + $0x18] sm:$0xff] %v2646
      %2775 = vst [vmem:[#allocation12 + $0x20] sm:$0xff] %v2647
      %2776 = vst [vmem:[#allocation12 + $0x28] sm:$0xff] %v2648
      %2777 = vst [vmem:[#allocation12 + $0x30] sm:$0xff] %v2649
      %2778 = vst [vmem:[#allocation12 + $0x38] sm:$0xff] %v2650
      %2779 = vst [vmem:[#allocation12 + $0x40] sm:$0xff] %v2651
      %2780 = vst [vmem:[#allocation12 + $0x48] sm:$0xff] %v2652
      %2781 = vst [vmem:[#allocation12 + $0x50] sm:$0xff] %v2653
      %2782 = vst [vmem:[#allocation12 + $0x58] sm:$0xff] %v2654
      %2783 = vst [vmem:[#allocation12 + $0x60] sm:$0xff] %v2655
      %2784 = vst [vmem:[#allocation12 + $0x68] sm:$0xff] %v2656
      %2785 = vst [vmem:[#allocation12 + $0x70] sm:$0xff] %v2657
      %2786 = vst [vmem:[#allocation12 + $0x78] sm:$0xff] %v2658
      %2787 = vst [vmem:[#allocation12 + $0x80] sm:$0xff] %v2659
      %2788 = vst [vmem:[#allocation12 + $0x88] sm:$0xff] %v2660
      %2789 = vst [vmem:[#allocation12 + $0x90] sm:$0xff] %v2661
      %2790 = vst [vmem:[#allocation12 + $0x98] sm:$0xff] %v2662
      %2791 = vst [vmem:[#allocation12 + $0xa0] sm:$0xff] %v2663
      %2792 = vst [vmem:[#allocation12 + $0xa8] sm:$0xff] %v2664
      %2793 = vst [vmem:[#allocation12 + $0xb0] sm:$0xff] %v2665
      %2794 = vst [vmem:[#allocation12 + $0xb8] sm:$0xff] %v2666
      %2795 = vst [vmem:[#allocation12 + $0xc0] sm:$0xff] %v2667
      %2796 = vst [vmem:[#allocation12 + $0xc8] sm:$0xff] %v2668
      %2797 = vst [vmem:[#allocation12 + $0xd0] sm:$0xff] %v2669
      %2798 = vst [vmem:[#allocation12 + $0xd8] sm:$0xff] %v2670
      %2799 = vst [vmem:[#allocation12 + $0xe0] sm:$0xff] %v2671
      %2800 = vst [vmem:[#allocation12 + $0xe8] sm:$0xff] %v2672
      %2801 = vst [vmem:[#allocation12 + $0xf0] sm:$0xff] %v2673
      %2802 = vst [vmem:[#allocation12 + $0xf8] sm:$0xff] %v2674
      %2803 = vst [vmem:[#allocation12 + $0x100] sm:$0xff] %v2675
      %2804 = vst [vmem:[#allocation12 + $0x108] sm:$0xff] %v2676
      %2805 = vst [vmem:[#allocation12 + $0x110] sm:$0xff] %v2677
      %2806 = vst [vmem:[#allocation12 + $0x118] sm:$0xff] %v2678
      %2807 = vst [vmem:[#allocation12 + $0x120] sm:$0xff] %v2679
      %2808 = vst [vmem:[#allocation12 + $0x128] sm:$0xff] %v2680
      %2809 = vst [vmem:[#allocation12 + $0x130] sm:$0xff] %v2681
      %2810 = vst [vmem:[#allocation12 + $0x138] sm:$0xff] %v2682
      %2811 = vst [vmem:[#allocation12 + $0x140] sm:$0xff] %v2683
      %2812 = vst [vmem:[#allocation12 + $0x148] sm:$0xff] %v2684
      %2813 = vst [vmem:[#allocation12 + $0x150] sm:$0xff] %v2685
      %2814 = vst [vmem:[#allocation12 + $0x158] sm:$0xff] %v2686
      %2815 = vst [vmem:[#allocation12 + $0x160] sm:$0xff] %v2687
      %2816 = vst [vmem:[#allocation12 + $0x168] sm:$0xff] %v2688
      %2817 = vst [vmem:[#allocation12 + $0x170] sm:$0xff] %v2689
      %2818 = vst [vmem:[#allocation12 + $0x178] sm:$0xff] %v2690
      %2819 = vst [vmem:[#allocation12 + $0x180] sm:$0xff] %v2691
      %2820 = vst [vmem:[#allocation12 + $0x188] sm:$0xff] %v2692
      %2821 = vst [vmem:[#allocation12 + $0x190] sm:$0xff] %v2693
      %2822 = vst [vmem:[#allocation12 + $0x198] sm:$0xff] %v2694
      %2823 = vst [vmem:[#allocation12 + $0x1a0] sm:$0xff] %v2695
      %2824 = vst [vmem:[#allocation12 + $0x1a8] sm:$0xff] %v2696
      %2825 = vst [vmem:[#allocation12 + $0x1b0] sm:$0xff] %v2697
      %2826 = vst [vmem:[#allocation12 + $0x1b8] sm:$0xff] %v2698
      %2827 = vst [vmem:[#allocation12 + $0x1c0] sm:$0xff] %v2699
      %2828 = vst [vmem:[#allocation12 + $0x1c8] sm:$0xff] %v2700
      %2829 = vst [vmem:[#allocation12 + $0x1d0] sm:$0xff] %v2701
      %2830 = vst [vmem:[#allocation12 + $0x1d8] sm:$0xff] %v2702
      %2831 = vst [vmem:[#allocation12 + $0x1e0] sm:$0xff] %v2703
      %2832 = vst [vmem:[#allocation12 + $0x1e8] sm:$0xff] %v2704
      %2833 = vst [vmem:[#allocation12 + $0x1f0] sm:$0xff] %v2705
      %2834 = vst [vmem:[#allocation12 + $0x1f8] sm:$0xff] %v2706
      %2835 = vst [vmem:[#allocation12 + $0x200] sm:$0xff] %v2707
      %2836 = vst [vmem:[#allocation12 + $0x208] sm:$0xff] %v2708
      %2837 = vst [vmem:[#allocation12 + $0x210] sm:$0xff] %v2709
      %2838 = vst [vmem:[#allocation12 + $0x218] sm:$0xff] %v2710
      %2839 = vst [vmem:[#allocation12 + $0x220] sm:$0xff] %v2711
      %2840 = vst [vmem:[#allocation12 + $0x228] sm:$0xff] %v2712
      %2841 = vst [vmem:[#allocation12 + $0x230] sm:$0xff] %v2713
      %2842 = vst [vmem:[#allocation12 + $0x238] sm:$0xff] %v2714
      %2843 = vst [vmem:[#allocation12 + $0x240] sm:$0xff] %v2715
      %2844 = vst [vmem:[#allocation12 + $0x248] sm:$0xff] %v2716
      %2845 = vst [vmem:[#allocation12 + $0x250] sm:$0xff] %v2717
      %2846 = vst [vmem:[#allocation12 + $0x258] sm:$0xff] %v2718
      %2847 = vst [vmem:[#allocation12 + $0x260] sm:$0xff] %v2719
      %2848 = vst [vmem:[#allocation12 + $0x268] sm:$0xff] %v2720
      %2849 = vst [vmem:[#allocation12 + $0x270] sm:$0xff] %v2721
      %2850 = vst [vmem:[#allocation12 + $0x278] sm:$0xff] %v2722
      %2851 = vst [vmem:[#allocation12 + $0x280] sm:$0xff] %v2723
      %2852 = vst [vmem:[#allocation12 + $0x288] sm:$0xff] %v2724
      %2853 = vst [vmem:[#allocation12 + $0x290] sm:$0xff] %v2725
      %2854 = vst [vmem:[#allocation12 + $0x298] sm:$0xff] %v2726
      %2855 = vst [vmem:[#allocation12 + $0x2a0] sm:$0xff] %v2727
      %2856 = vst [vmem:[#allocation12 + $0x2a8] sm:$0xff] %v2728
      %2857 = vst [vmem:[#allocation12 + $0x2b0] sm:$0xff] %v2729
      %2858 = vst [vmem:[#allocation12 + $0x2b8] sm:$0xff] %v2730
      %2859 = vst [vmem:[#allocation12 + $0x2c0] sm:$0xff] %v2731
      %2860 = vst [vmem:[#allocation12 + $0x2c8] sm:$0xff] %v2732
      %2861 = vst [vmem:[#allocation12 + $0x2d0] sm:$0xff] %v2733
      %2862 = vst [vmem:[#allocation12 + $0x2d8] sm:$0xff] %v2734
      %2863 = vst [vmem:[#allocation12 + $0x2e0] sm:$0xff] %v2735
      %2864 = vst [vmem:[#allocation12 + $0x2e8] sm:$0xff] %v2736
      %2865 = vst [vmem:[#allocation12 + $0x2f0] sm:$0xff] %v2737
      %2866 = vst [vmem:[#allocation12 + $0x2f8] sm:$0xff] %v2738
      %2867 = vst [vmem:[#allocation12 + $0x300] sm:$0xff] %v2739
      %2868 = vst [vmem:[#allocation12 + $0x308] sm:$0xff] %v2740
      %2869 = vst [vmem:[#allocation12 + $0x310] sm:$0xff] %v2741
      %2870 = vst [vmem:[#allocation12 + $0x318] sm:$0xff] %v2742
      %2871 = vst [vmem:[#allocation12 + $0x320] sm:$0xff] %v2743
      %2872 = vst [vmem:[#allocation12 + $0x328] sm:$0xff] %v2744
      %2873 = vst [vmem:[#allocation12 + $0x330] sm:$0xff] %v2745
      %2874 = vst [vmem:[#allocation12 + $0x338] sm:$0xff] %v2746
      %2875 = vst [vmem:[#allocation12 + $0x340] sm:$0xff] %v2747
      %2876 = vst [vmem:[#allocation12 + $0x348] sm:$0xff] %v2748
      %2877 = vst [vmem:[#allocation12 + $0x350] sm:$0xff] %v2749
      %2878 = vst [vmem:[#allocation12 + $0x358] sm:$0xff] %v2750
      %2879 = vst [vmem:[#allocation12 + $0x360] sm:$0xff] %v2751
      %2880 = vst [vmem:[#allocation12 + $0x368] sm:$0xff] %v2752
      %2881 = vst [vmem:[#allocation12 + $0x370] sm:$0xff] %v2753
      %2882 = vst [vmem:[#allocation12 + $0x378] sm:$0xff] %v2754
      %2883 = vst [vmem:[#allocation12 + $0x380] sm:$0xff] %v2755
      %2884 = vst [vmem:[#allocation12 + $0x388] sm:$0xff] %v2756
      %2885 = vst [vmem:[#allocation12 + $0x390] sm:$0xff] %v2757
      %2886 = vst [vmem:[#allocation12 + $0x398] sm:$0xff] %v2758
      %2887 = vst [vmem:[#allocation12 + $0x3a0] sm:$0xff] %v2759
      %2888 = vst [vmem:[#allocation12 + $0x3a8] sm:$0xff] %v2760
      %2889 = vst [vmem:[#allocation12 + $0x3b0] sm:$0xff] %v2761
      %2890 = vst [vmem:[#allocation12 + $0x3b8] sm:$0xff] %v2762
      %2891 = vst [vmem:[#allocation12 + $0x3c0] sm:$0xff] %v2763
      %2892 = vst [vmem:[#allocation12 + $0x3c8] sm:$0xff] %v2764
      %2893 = vst [vmem:[#allocation12 + $0x3d0] sm:$0xff] %v2765
      %2894 = vst [vmem:[#allocation12 + $0x3d8] sm:$0xff] %v2766
      %2895 = vst [vmem:[#allocation12 + $0x3e0] sm:$0xff] %v2767
      %2896 = vst [vmem:[#allocation12 + $0x3e8] sm:$0xff] %v2768
      %2897 = vst [vmem:[#allocation12 + $0x3f0] sm:$0xff] %v2769
      %2898 = vst [vmem:[#allocation12 + $0x3f8] sm:$0xff] %v2770
    $region45: #{xvector_trainer_forward.1} parent=1 // pred_fallthru
      _
    // Predicated region
    $region46: #{xvector_trainer_forward.1} parent=1 // pred_check
      _
    $region47: #{xvector_trainer_forward.1} parent=1 // pred_check_branch
      %2900 = sbr.rel (0) target = $region49
    $region48: #{xvector_trainer_forward.1} parent=1 // pred_region
      %s2902 = ssub.s32 16384, 16384
      %2903 = vsyncadd [#allocation6], %s2902
      %s2904 = sshll.u32 [#allocation12], 4
      %s2905 = int_to_ptr.vmem [resolvable:$true] %s2904
      %2910 = dma.vmem_to_hbm [thread:$0]  %s2905, 16384, %s5, [#allocation6], 512, 512, 32
    $region49: #{xvector_trainer_forward.1} parent=1 // pred_fallthru
      _
    // Predicated region
    $region50: #{xvector_trainer_forward.1} parent=1 // pred_check
      _
    $region51: #{xvector_trainer_forward.1} parent=1 // pred_check_branch
      %2912 = sbr.rel (0) target = $region53
    $region52: #{xvector_trainer_forward.1} parent=1 // pred_region
      %2913 = dma.done [#allocation6], 16384
    $region53: #{xvector_trainer_forward.1} parent=1 // pred_fallthru
      _
    %2914 = vsyncpa [#allocation5], 1
    %2915 = vsyncpa [#allocation8], 1
    %2916 = vsyncpa [#allocation11], 1
    %2917 = vsyncpa [#allocation6], 1

</llo_original>
